<compile_context>
chip_gen: v6e
topology: v6e:2x2x1
jax: 0.10.0
libtpu: 0.0.40
codegen_flags: <defaults>
</compile_context>

<pallas_src>
import functools

import jax
import jax.numpy as jnp
from jax.experimental import pallas as pl
from jax.experimental.pallas import tpu as pltpu


# ----------------------------------------------------------------------------
# helpers
# ----------------------------------------------------------------------------
def _cdiv(a, b):
    return (a + b - 1) // b


def _round_up(n, m):
    return _cdiv(n, m) * m


_SQRT_2_OVER_PI = 0.7978845608028654
_GELU_K = 0.044715


def _tanh_gelu(h, dtype):
    # nn.GELU(approximate='tanh'):
    #   0.5 * x * (1 + tanh(sqrt(2/pi) * (x + 0.044715 * x^3)))
    # Constant-folded: inner = x * (c + (c*k) * x^2)  (saves one VALU op/elem).
    h = h.astype(dtype)
    h2 = h * h
    inner = h * (_SQRT_2_OVER_PI + (_SQRT_2_OVER_PI * _GELU_K) * h2)
    return 0.5 * h * (1.0 + jnp.tanh(inner))


def _chip_generation():
    try:
        kind = jax.devices()[0].device_kind.lower()
    except Exception:
        kind = ""
    for tag in ("v7", "v6", "v5"):
        if tag in kind:
            return tag
    return ""


def _vmem_budgets(gen):
    """(planning budget for the residency decision, Mosaic vmem_limit_bytes)."""
    if gen == "v7":  # 64 MiB physical per TensorCore
        return 44 * 1024 * 1024, 56 * 1024 * 1024
    # v5e / v6e: 128 MiB physical
    return 88 * 1024 * 1024, 100 * 1024 * 1024


def _pick_th(H, th_max, mult):
    """Largest divisor of H that is a multiple of `mult` and <= th_max."""
    best = None
    d = mult
    while d <= min(H, th_max):
        if H % d == 0:
            best = d
        d += mult
    return best if best is not None else H


# ----------------------------------------------------------------------------
# kernels
# ----------------------------------------------------------------------------
def _mlp_resident_kernel(x_ref, w1_ref, b1_ref, w2_ref, b2_ref, o_ref, *, gelu_dtype):
    """Grid: (row tiles,). Full w1/w2/b1/b2 resident in VMEM (DMA'd once)."""
    h = jnp.dot(x_ref[...], w1_ref[...], preferred_element_type=jnp.float32)
    h = h + b1_ref[...]                       # f32 bias add
    h = _tanh_gelu(h, gelu_dtype)             # bf16 on v6e/v7x, f32 on v5e
    y = jnp.dot(h.astype(w2_ref.dtype), w2_ref[...],
                preferred_element_type=jnp.float32)
    o_ref[...] = (y + b2_ref[...]).astype(o_ref.dtype)


def _mlp_tiled_kernel(x_ref, w1_ref, b1_ref, w2_ref, b2_ref, o_ref, acc_ref, *,
                      gelu_dtype):
    """Grid: (row tiles [parallel], hidden tiles [arbitrary, innermost])."""
    j = pl.program_id(1)

    @pl.when(j == 0)
    def _():
        acc_ref[...] = jnp.zeros_like(acc_ref)

    h = jnp.dot(x_ref[...], w1_ref[...], preferred_element_type=jnp.float32)
    h = h + b1_ref[...]
    h = _tanh_gelu(h, gelu_dtype)
    acc_ref[...] += jnp.dot(h.astype(w2_ref.dtype), w2_ref[...],
                            preferred_element_type=jnp.float32)

    @pl.when(j == pl.num_programs(1) - 1)
    def _():
        o_ref[...] = (acc_ref[...] + b2_ref[...]).astype(o_ref.dtype)


# ----------------------------------------------------------------------------
# wrapper
# ----------------------------------------------------------------------------
def mlp_pallas(x, w1, b1, w2, b2, *, tm=512, th=1024,
               compute_dtype=jnp.bfloat16, out_dtype=None,
               force_hidden_tiling=False):
    """x: (B, T, C); w1: (C, 4C); b1: (4C,); w2: (4C, C); b2: (C,)."""
    B, T, C = x.shape
    H = w1.shape[1]
    M = B * T
    out_dtype = x.dtype if out_dtype is None else out_dtype

    gen = _chip_generation()
    plan_budget, vmem_limit = _vmem_budgets(gen)
    # bf16 VPU/EUP exist on v6e/v7x; keep the GELU in f32 on v5e (and whenever
    # the compute path is already f32).
    gelu_dtype = (jnp.float32
                  if (gen == "v5" or jnp.dtype(compute_dtype) == jnp.float32)
                  else jnp.dtype(compute_dtype))

    # ---- row tile -----------------------------------------------------------
    tm_eff = min(tm, _round_up(M, 16))
    # v7x megacore: make sure the "parallel" rows axis has >= 2 tiles when the
    # problem allows it, so both TensorCores get work.
    if M > 16 and _cdiv(M, tm_eff) < 2:
        tm_eff = max(16, _round_up(_cdiv(M, 2), 16))
    n_row_tiles = _cdiv(M, tm_eff)  # ragged last tile: Pallas masks its writes

    itemsize_c = jnp.dtype(compute_dtype).itemsize
    itemsize_o = jnp.dtype(out_dtype).itemsize
    itemsize_g = jnp.dtype(gelu_dtype).itemsize

    # ---- residency decision (per-generation VMEM budget) --------------------
    resident_bytes = (
        2 * C * H * itemsize_c               # w1 + w2, single-buffered
        + (H + C) * 4                        # biases (f32), single-buffered
        + 2 * tm_eff * C * itemsize_c        # x tile, double-buffered
        + 2 * tm_eff * C * itemsize_o        # out tile, double-buffered
        + tm_eff * H * (4 + itemsize_g)      # pre-GELU f32 + post-GELU temps
    )
    use_resident = (not force_hidden_tiling) and \
        (resident_bytes * 12) // 10 < plan_budget  # 20% headroom

    # ---- operands (no wrapper-side padding of x) -----------------------------
    x2 = x.reshape(M, C).astype(compute_dtype)
    w1c = w1.astype(compute_dtype)
    w2c = w2.astype(compute_dtype)
    b1_2 = b1.reshape(1, H).astype(jnp.float32)
    b2_2 = b2.reshape(1, C).astype(jnp.float32)

    cost = pl.CostEstimate(
        flops=4 * M * C * H + 8 * M * H,
        transcendentals=M * H,
        bytes_accessed=(M * C * itemsize_c + 2 * C * H * itemsize_c
                        + (H + C) * 4 + M * C * itemsize_o),
    )

    def _call(use_buffered):
        def spec(shape, index_map, single_buffer):
            if single_buffer and use_buffered:
                return pl.BlockSpec(shape, index_map,
                                    pipeline_mode=pl.Buffered(1))
            return pl.BlockSpec(shape, index_map)

        if use_resident:
            kernel = functools.partial(_mlp_resident_kernel,
                                       gelu_dtype=gelu_dtype)
            grid = (n_row_tiles,)
            in_specs = [
                spec((tm_eff, C), lambda i: (i, 0), False),  # x (changes / step)
                spec((C, H), lambda i: (0, 0), True),        # w1 resident
                spec((1, H), lambda i: (0, 0), True),        # b1 resident
                spec((H, C), lambda i: (0, 0), True),        # w2 resident
                spec((1, C), lambda i: (0, 0), True),        # b2 resident
            ]
            out_specs = pl.BlockSpec((tm_eff, C), lambda i: (i, 0))
            scratch_shapes = []
            dim_sem = ("parallel",)
        else:
            lane_mult = 128 if gen == "v5" else 256
            th_eff = _pick_th(H, th, lane_mult)
            kernel = functools.partial(_mlp_tiled_kernel, gelu_dtype=gelu_dtype)
            grid = (n_row_tiles, H // th_eff)
            in_specs = [
                spec((tm_eff, C), lambda i, j: (i, 0), True),   # x const over j
                spec((C, th_eff), lambda i, j: (0, j), False),  # w1 H-slice
                spec((1, th_eff), lambda i, j: (0, j), False),  # b1 H-slice
                spec((th_eff, C), lambda i, j: (j, 0), False),  # w2 H-slice
                spec((1, C), lambda i, j: (0, 0), True),        # b2 const
            ]
            out_specs = pl.BlockSpec((tm_eff, C), lambda i, j: (i, 0))
            scratch_shapes = [pltpu.VMEM((tm_eff, C), jnp.float32)]
            dim_sem = ("parallel", "arbitrary")

        return pl.pallas_call(
            kernel,
            out_shape=jax.ShapeDtypeStruct((M, C), out_dtype),
            grid_spec=pltpu.PrefetchScalarGridSpec(
                num_scalar_prefetch=0,
                grid=grid,
                in_specs=in_specs,
                out_specs=out_specs,
                scratch_shapes=scratch_shapes,
            ),
            compiler_params=pltpu.CompilerParams(
                dimension_semantics=dim_sem,
                vmem_limit_bytes=vmem_limit,
            ),
            cost_estimate=cost,
        )(x2, w1c, b1_2, w2c, b2_2)

    try:
        out2 = _call(use_buffered=True)
    except Exception:
        # Fallback for jax versions where pipeline_mode=pl.Buffered(1) is not
        # supported; identical semantics, default double-buffering.
        out2 = _call(use_buffered=False)

    return out2.reshape(B, T, C)


def mlp_reference(x, w1, b1, w2, b2):
    """Pure-JAX (f32) reference of the PyTorch forward."""
    h = jnp.dot(x, w1) + b1
    c = 0.7978845608028654
    h = 0.5 * h * (1.0 + jnp.tanh(c * (h + 0.044715 * h ** 3)))
    return jnp.dot(h, w2) + b2


if __name__ == "__main__":
    # Small config consistent with the module: n_embd = 128 -> hidden = 512.
    # (C a multiple of 128 keeps the output stores lane-dense.)
    B, T, C = 2, 8, 128
    H = 4 * C

    key = jax.random.PRNGKey(0)
    kx, k1, k2, k3, k4 = jax.random.split(key, 5)

    x = jax.random.normal(kx, (B, T, C), dtype=jnp.float32)
    w1 = jax.random.normal(k1, (C, H), dtype=jnp.float32) * 0.02
    b1 = jax.random.normal(k3, (H,), dtype=jnp.float32) * 0.01
    w2 = jax.random.normal(k2, (H, C), dtype=jnp.float32) * 0.02
    b2 = jax.random.normal(k4, (C,), dtype=jnp.float32) * 0.01

    ref = mlp_reference(x, w1, b1, w2, b2)

    # 1) f32 compute path (resident-weight kernel) vs reference.
    out_f32 = jax.block_until_ready(
        mlp_pallas(x, w1, b1, w2, b2, compute_dtype=jnp.float32)
    )
    assert out_f32.shape == (B, T, C)
    assert float(jnp.max(jnp.abs(out_f32 - ref))) < 5e-3, "f32 path mismatch"

    # 2) Default bf16 MXU path with f32 accumulation (resident weights).
    out_bf16 = jax.block_until_ready(mlp_pallas(x, w1, b1, w2, b2))
    assert out_bf16.shape == (B, T, C)
    assert float(jnp.max(jnp.abs(out_bf16 - ref))) < 5e-2, "bf16 path mismatch"

    # 3) Force the H-tiled accumulator kernel (large-model fallback path) to
    #    make sure both code paths stay correct.
    out_tiled = jax.block_until_ready(
        mlp_pallas(x, w1, b1, w2, b2, force_hidden_tiling=True)
    )
    assert out_tiled.shape == (B, T, C)
    assert float(jnp.max(jnp.abs(out_tiled - ref))) < 5e-2, "tiled path mismatch"

    print("KERNEL_OK")
</pallas_src>

<mosaic_0001>
module attributes {stable_mosaic.version = 11 : i64} {
  func.func @_mlp_resident_kernel(%arg0: i32, %arg1: memref<16x128xf32, #tpu.memory_space<vmem>>, %arg2: memref<128x512xf32, #tpu.memory_space<vmem>>, %arg3: memref<1x512xf32, #tpu.memory_space<vmem>>, %arg4: memref<512x128xf32, #tpu.memory_space<vmem>>, %arg5: memref<1x128xf32, #tpu.memory_space<vmem>>, %arg6: memref<16x128xf32, #tpu.memory_space<vmem>>) attributes {dimension_semantics = [#tpu.dimension_semantics<parallel>], iteration_bounds = array<i64: 1>, scalar_prefetch = 0 : i64, scratch_operands = 0 : i64, tpu.core_type = #tpu.core_type<tc>, window_params = [{transform_indices = @transform_0, window_bounds = array<i64: 16, 128>}, {pipeline_mode = #tpu.pipeline_mode<synchronous>, transform_indices = @transform_1, window_bounds = array<i64: 128, 512>}, {pipeline_mode = #tpu.pipeline_mode<synchronous>, transform_indices = @transform_2, window_bounds = array<i64: 1, 512>}, {pipeline_mode = #tpu.pipeline_mode<synchronous>, transform_indices = @transform_3, window_bounds = array<i64: 512, 128>}, {pipeline_mode = #tpu.pipeline_mode<synchronous>, transform_indices = @transform_4, window_bounds = array<i64: 1, 128>}, {transform_indices = @transform_5, window_bounds = array<i64: 16, 128>}]} {
    %c0 = arith.constant 0 : index
    %c0_0 = arith.constant 0 : index
    %0 = vector.load %arg1[%c0, %c0_0] : memref<16x128xf32, #tpu.memory_space<vmem>>, vector<16x128xf32>
    %c0_1 = arith.constant 0 : index
    %c0_2 = arith.constant 0 : index
    %1 = vector.load %arg2[%c0_1, %c0_2] : memref<128x512xf32, #tpu.memory_space<vmem>>, vector<128x512xf32>
    %cst = arith.constant dense<0.000000e+00> : vector<16x512xf32>
    %2 = tpu.matmul %0, %1, %cst {dimension_numbers = #tpu.dot_dimension_numbers<[1], [0], [0], [1], [0, 0, 1, 1], [], []>} : vector<16x128xf32>, vector<128x512xf32>, vector<16x512xf32> -> vector<16x512xf32>
    %c0_3 = arith.constant 0 : index
    %c0_4 = arith.constant 0 : index
    %3 = vector.load %arg3[%c0_3, %c0_4] : memref<1x512xf32, #tpu.memory_space<vmem>>, vector<1x512xf32>
    %4 = vector.broadcast %3 : vector<1x512xf32> to vector<16x512xf32>
    %5 = arith.addf %2, %4 : vector<16x512xf32>
    %6 = arith.mulf %5, %5 : vector<16x512xf32>
    %cst_5 = arith.constant 0.0356774069 : f32
    %7 = vector.broadcast %cst_5 : f32 to vector<16x512xf32>
    %8 = arith.mulf %7, %6 : vector<16x512xf32>
    %cst_6 = arith.constant 0.797884583 : f32
    %9 = vector.broadcast %cst_6 : f32 to vector<16x512xf32>
    %10 = arith.addf %9, %8 : vector<16x512xf32>
    %11 = arith.mulf %5, %10 : vector<16x512xf32>
    %cst_7 = arith.constant 5.000000e-01 : f32
    %12 = vector.broadcast %cst_7 : f32 to vector<16x512xf32>
    %13 = arith.mulf %12, %5 : vector<16x512xf32>
    %14 = math.tanh %11 : vector<16x512xf32>
    %cst_8 = arith.constant 1.000000e+00 : f32
    %15 = vector.broadcast %cst_8 : f32 to vector<16x512xf32>
    %16 = arith.addf %15, %14 : vector<16x512xf32>
    %17 = arith.mulf %13, %16 : vector<16x512xf32>
    %c0_9 = arith.constant 0 : index
    %c0_10 = arith.constant 0 : index
    %18 = vector.load %arg4[%c0_9, %c0_10] : memref<512x128xf32, #tpu.memory_space<vmem>>, vector<512x128xf32>
    %cst_11 = arith.constant dense<0.000000e+00> : vector<16x128xf32>
    %19 = tpu.matmul %17, %18, %cst_11 {dimension_numbers = #tpu.dot_dimension_numbers<[1], [0], [0], [1], [0, 0, 1, 1], [], []>} : vector<16x512xf32>, vector<512x128xf32>, vector<16x128xf32> -> vector<16x128xf32>
    %c0_12 = arith.constant 0 : index
    %c0_13 = arith.constant 0 : index
    %20 = vector.load %arg5[%c0_12, %c0_13] : memref<1x128xf32, #tpu.memory_space<vmem>>, vector<1x128xf32>
    %21 = vector.broadcast %20 : vector<1x128xf32> to vector<16x128xf32>
    %22 = arith.addf %19, %21 : vector<16x128xf32>
    %c0_14 = arith.constant 0 : index
    %c0_15 = arith.constant 0 : index
    %23 = vector.load %arg6[%c0_14, %c0_15] : memref<16x128xf32, #tpu.memory_space<vmem>>, vector<16x128xf32>
    tpu.vector_store %arg6[%c0_14, %c0_15], %22 {strides = array<i32>} : memref<16x128xf32, #tpu.memory_space<vmem>>, vector<16x128xf32>,
    return
  }
  func.func @transform_0(%arg0: i32) -> (i32, i32) {
    %c0_i32 = arith.constant 0 : i32
    %c0_i32_0 = arith.constant 0 : i32
    return %arg0, %c0_i32 : i32, i32
  }
  func.func @transform_1(%arg0: i32) -> (i32, i32) {
    %c0_i32 = arith.constant 0 : i32
    %c0_i32_0 = arith.constant 0 : i32
    %c0_i32_1 = arith.constant 0 : i32
    return %c0_i32, %c0_i32_0 : i32, i32
  }
  func.func @transform_2(%arg0: i32) -> (i32, i32) {
    %c0_i32 = arith.constant 0 : i32
    %c0_i32_0 = arith.constant 0 : i32
    %c0_i32_1 = arith.constant 0 : i32
    return %c0_i32, %c0_i32_0 : i32, i32
  }
  func.func @transform_3(%arg0: i32) -> (i32, i32) {
    %c0_i32 = arith.constant 0 : i32
    %c0_i32_0 = arith.constant 0 : i32
    %c0_i32_1 = arith.constant 0 : i32
    return %c0_i32, %c0_i32_0 : i32, i32
  }
  func.func @transform_4(%arg0: i32) -> (i32, i32) {
    %c0_i32 = arith.constant 0 : i32
    %c0_i32_0 = arith.constant 0 : i32
    %c0_i32_1 = arith.constant 0 : i32
    return %c0_i32, %c0_i32_0 : i32, i32
  }
  func.func @transform_5(%arg0: i32) -> (i32, i32) {
    %c0_i32 = arith.constant 0 : i32
    %c0_i32_0 = arith.constant 0 : i32
    return %arg0, %c0_i32 : i32, i32
  }
}

module attributes {stable_mosaic.version = 11 : i64} {
  func.func @_mlp_resident_kernel(%arg0: i32, %arg1: memref<16x128xf32, #tpu.memory_space<vmem>>, %arg2: memref<128x512xf32, #tpu.memory_space<vmem>>, %arg3: memref<1x512xf32, #tpu.memory_space<vmem>>, %arg4: memref<512x128xf32, #tpu.memory_space<vmem>>, %arg5: memref<1x128xf32, #tpu.memory_space<vmem>>, %arg6: memref<16x128xf32, #tpu.memory_space<vmem>>) attributes {dimension_semantics = [#tpu.dimension_semantics<parallel>], iteration_bounds = array<i64: 1>, scalar_prefetch = 0 : i64, scratch_operands = 0 : i64, tpu.core_type = #tpu.core_type<tc>, window_params = [{transform_indices = @transform_0, window_bounds = array<i64: 16, 128>}, {pipeline_mode = #tpu.pipeline_mode<synchronous>, transform_indices = @transform_1, window_bounds = array<i64: 128, 512>}, {pipeline_mode = #tpu.pipeline_mode<synchronous>, transform_indices = @transform_2, window_bounds = array<i64: 1, 512>}, {pipeline_mode = #tpu.pipeline_mode<synchronous>, transform_indices = @transform_3, window_bounds = array<i64: 512, 128>}, {pipeline_mode = #tpu.pipeline_mode<synchronous>, transform_indices = @transform_4, window_bounds = array<i64: 1, 128>}, {transform_indices = @transform_5, window_bounds = array<i64: 16, 128>}]} {
    %c0 = arith.constant 0 : index
    %c0_0 = arith.constant 0 : index
    %0 = vector.load %arg1[%c0, %c0_0] : memref<16x128xf32, #tpu.memory_space<vmem>>, vector<16x128xf32>
    %c0_1 = arith.constant 0 : index
    %c0_2 = arith.constant 0 : index
    %1 = vector.load %arg2[%c0_1, %c0_2] : memref<128x512xf32, #tpu.memory_space<vmem>>, vector<128x512xf32>
    %cst = arith.constant dense<0.000000e+00> : vector<16x512xf32>
    %2 = tpu.matmul %0, %1, %cst {dimension_numbers = #tpu.dot_dimension_numbers<[1], [0], [0], [1], [0, 0, 1, 1], [], []>} : vector<16x128xf32>, vector<128x512xf32>, vector<16x512xf32> -> vector<16x512xf32>
    %c0_3 = arith.constant 0 : index
    %c0_4 = arith.constant 0 : index
    %3 = vector.load %arg3[%c0_3, %c0_4] : memref<1x512xf32, #tpu.memory_space<vmem>>, vector<1x512xf32>
    %4 = vector.broadcast %3 : vector<1x512xf32> to vector<16x512xf32>
    %5 = arith.addf %2, %4 : vector<16x512xf32>
    %6 = arith.mulf %5, %5 : vector<16x512xf32>
    %cst_5 = arith.constant 0.0356774069 : f32
    %7 = vector.broadcast %cst_5 : f32 to vector<16x512xf32>
    %8 = arith.mulf %7, %6 : vector<16x512xf32>
    %cst_6 = arith.constant 0.797884583 : f32
    %9 = vector.broadcast %cst_6 : f32 to vector<16x512xf32>
    %10 = arith.addf %9, %8 : vector<16x512xf32>
    %11 = arith.mulf %5, %10 : vector<16x512xf32>
    %cst_7 = arith.constant 5.000000e-01 : f32
    %12 = vector.broadcast %cst_7 : f32 to vector<16x512xf32>
    %13 = arith.mulf %12, %5 : vector<16x512xf32>
    %14 = math.tanh %11 : vector<16x512xf32>
    %cst_8 = arith.constant 1.000000e+00 : f32
    %15 = vector.broadcast %cst_8 : f32 to vector<16x512xf32>
    %16 = arith.addf %15, %14 : vector<16x512xf32>
    %17 = arith.mulf %13, %16 : vector<16x512xf32>
    %c0_9 = arith.constant 0 : index
    %c0_10 = arith.constant 0 : index
    %18 = vector.load %arg4[%c0_9, %c0_10] : memref<512x128xf32, #tpu.memory_space<vmem>>, vector<512x128xf32>
    %cst_11 = arith.constant dense<0.000000e+00> : vector<16x128xf32>
    %19 = tpu.matmul %17, %18, %cst_11 {dimension_numbers = #tpu.dot_dimension_numbers<[1], [0], [0], [1], [0, 0, 1, 1], [], []>} : vector<16x512xf32>, vector<512x128xf32>, vector<16x128xf32> -> vector<16x128xf32>
    %c0_12 = arith.constant 0 : index
    %c0_13 = arith.constant 0 : index
    %20 = vector.load %arg5[%c0_12, %c0_13] : memref<1x128xf32, #tpu.memory_space<vmem>>, vector<1x128xf32>
    %21 = vector.broadcast %20 : vector<1x128xf32> to vector<16x128xf32>
    %22 = arith.addf %19, %21 : vector<16x128xf32>
    %c0_14 = arith.constant 0 : index
    %c0_15 = arith.constant 0 : index
    %23 = vector.load %arg6[%c0_14, %c0_15] : memref<16x128xf32, #tpu.memory_space<vmem>>, vector<16x128xf32>
    tpu.vector_store %arg6[%c0_14, %c0_15], %22 {strides = array<i32>} : memref<16x128xf32, #tpu.memory_space<vmem>>, vector<16x128xf32>,
    return
  }
  func.func @transform_0(%arg0: i32) -> (i32, i32) {
    %c0_i32 = arith.constant 0 : i32
    %c0_i32_0 = arith.constant 0 : i32
    return %arg0, %c0_i32 : i32, i32
  }
  func.func @transform_1(%arg0: i32) -> (i32, i32) {
    %c0_i32 = arith.constant 0 : i32
    %c0_i32_0 = arith.constant 0 : i32
    %c0_i32_1 = arith.constant 0 : i32
    return %c0_i32, %c0_i32_0 : i32, i32
  }
  func.func @transform_2(%arg0: i32) -> (i32, i32) {
    %c0_i32 = arith.constant 0 : i32
    %c0_i32_0 = arith.constant 0 : i32
    %c0_i32_1 = arith.constant 0 : i32
    return %c0_i32, %c0_i32_0 : i32, i32
  }
  func.func @transform_3(%arg0: i32) -> (i32, i32) {
    %c0_i32 = arith.constant 0 : i32
    %c0_i32_0 = arith.constant 0 : i32
    %c0_i32_1 = arith.constant 0 : i32
    return %c0_i32, %c0_i32_0 : i32, i32
  }
  func.func @transform_4(%arg0: i32) -> (i32, i32) {
    %c0_i32 = arith.constant 0 : i32
    %c0_i32_0 = arith.constant 0 : i32
    %c0_i32_1 = arith.constant 0 : i32
    return %c0_i32, %c0_i32_0 : i32, i32
  }
  func.func @transform_5(%arg0: i32) -> (i32, i32) {
    %c0_i32 = arith.constant 0 : i32
    %c0_i32_0 = arith.constant 0 : i32
    return %arg0, %c0_i32 : i32, i32
  }
}

</mosaic_0001>

<llo_original>
// kernel: tpu_custom_call.1
$region0: #{tpu_custom_call.1}
  #allocation0 [shape = 'u32[]', space=smem, size = 0x4, offset = 0x4, fixed_abs, tag = 'smem constant byte address 0x4 - core index']
  #allocation1 [shape = 'u32[144,128]{1,0:T(1,128)}', space=vmem, size = 0x12000, scoped, tag = 'internal scratch']
  %s0 = inlined_call_operand.hbm [shape: f32[16,128], index: 0, kind: input, shape index: {}]
  %s1 = inlined_call_operand.hbm [shape: f32[128,512], index: 1, kind: input, shape index: {}]
  %s2 = inlined_call_operand.hbm [shape: f32[1,512], index: 2, kind: input, shape index: {}]
  %s3 = inlined_call_operand.hbm [shape: f32[512,128], index: 3, kind: input, shape index: {}]
  %s4 = inlined_call_operand.vmem [shape: f32[1,128], index: 4, kind: input, shape index: {}]
  %s5 = inlined_call_operand.hbm [shape: f32[16,128], index: 5, kind: output, shape index: {}]
  %s6 = sld [smem:[#allocation0]]
  $region46: #{tpu_custom_call.1} parent=0
    _
  %s8 = ssub.s32 1, %s6
  %s9 = scalar_select 0, %s8, %s6
  $region1: #{tpu_custom_call.1} parent=0
    #allocation2 [shape = 'u8[8192]{0}', space=vmem, size = 0x2000, scoped, tag = 'input window, operand 0, single buffered']
    #allocation3 [shape = 's32[1]{0}', space=sflag, size = 0x4, scoped, tag = 'scoped memory for tpu_custom_call.1']
    #allocation4 [shape = 's32[1]{0}', space=sflag, size = 0x4, scoped, tag = 'scoped memory for tpu_custom_call.1']
    #allocation5 [shape = 'u8[262144]{0}', space=vmem, size = 0x40000, scoped, tag = 'input window, operand 1, single buffered']
    #allocation6 [shape = 's32[1]{0}', space=sflag, size = 0x4, scoped, tag = 'scoped memory for tpu_custom_call.1']
    #allocation7 [shape = 'u8[2048]{0}', space=vmem, size = 0x800, scoped, tag = 'input window, operand 2, single buffered']
    #allocation8 [shape = 'u8[262144]{0}', space=vmem, size = 0x40000, scoped, tag = 'input window, operand 3, single buffered']
    #allocation9 [shape = 's32[1]{0}', space=sflag, size = 0x4, scoped, tag = 'scoped memory for tpu_custom_call.1']
    #allocation10 [shape = 'u8[8192]{0}', space=vmem, size = 0x2000, scoped, tag = 'output window, operand 0, single buffered']
    %10 = vsyncpa [#allocation3], 0
    %11 = vsyncpa [#allocation6], 0
    %12 = vsyncpa [#allocation9], 0
    %13 = vsyncpa [#allocation4], 0
    // Predicated region
    $region2: #{tpu_custom_call.1} parent=1 // pred_check
      _
    $region3: #{tpu_custom_call.1} parent=1 // pred_check_branch
      %15 = sbr.rel (0) target = $region5
    $region4: #{tpu_custom_call.1} parent=1 // pred_region
      %s17 = ssub.s32 256, 256
      %18 = vsyncadd [#allocation3], %s17
      %s19 = sshll.u32 [#allocation2], 4
      %s20 = int_to_ptr.vmem [resolvable:$true] %s19
      %25 = dma.hbm_to_vmem [thread:$0]  %s0, 256, %s20, [#allocation3], 128, 128, 8
    $region5: #{tpu_custom_call.1} parent=1 // pred_fallthru
      _
    // Predicated region
    $region6: #{tpu_custom_call.1} parent=1 // pred_check
      _
    $region7: #{tpu_custom_call.1} parent=1 // pred_check_branch
      %27 = sbr.rel (0) target = $region9
    $region8: #{tpu_custom_call.1} parent=1 // pred_region
      %s29 = ssub.s32 8192, 8192
      %30 = vsyncadd [#allocation6], %s29
      %s31 = sshll.u32 [#allocation5], 4
      %s32 = int_to_ptr.vmem [resolvable:$true] %s31
      %37 = dma.hbm_to_vmem [thread:$0]  %s1, 8192, %s32, [#allocation6], 512, 512, 32
    $region9: #{tpu_custom_call.1} parent=1 // pred_fallthru
      _
    // Predicated region
    $region10: #{tpu_custom_call.1} parent=1 // pred_check
      _
    $region11: #{tpu_custom_call.1} parent=1 // pred_check_branch
      %39 = sbr.rel (0) target = $region13
    $region12: #{tpu_custom_call.1} parent=1 // pred_region
      %s41 = ssub.s32 64, 64
      %42 = vsyncadd [#allocation6], %s41
      %s44 = sshll.u32 [#allocation7], 4
      %s45 = int_to_ptr.vmem [resolvable:$true] %s44
      %47 = dma.hbm_to_vmem [thread:$0]  %s2, 64, %s45, [#allocation6]
    $region13: #{tpu_custom_call.1} parent=1 // pred_fallthru
      _
    // Predicated region
    $region14: #{tpu_custom_call.1} parent=1 // pred_check
      _
    $region15: #{tpu_custom_call.1} parent=1 // pred_check_branch
      %49 = sbr.rel (0) target = $region17
    $region16: #{tpu_custom_call.1} parent=1 // pred_region
      %s51 = ssub.s32 8192, 8192
      %52 = vsyncadd [#allocation9], %s51
      %s53 = sshll.u32 [#allocation8], 4
      %s54 = int_to_ptr.vmem [resolvable:$true] %s53
      %59 = dma.hbm_to_vmem [thread:$0]  %s3, 8192, %s54, [#allocation9], 128, 128, 8
    $region17: #{tpu_custom_call.1} parent=1 // pred_fallthru
      _
    // Predicated region
    $region18: #{tpu_custom_call.1} parent=1 // pred_check
      _
    $region19: #{tpu_custom_call.1} parent=1 // pred_check_branch
      %61 = sbr.rel (0) target = $region21
    $region20: #{tpu_custom_call.1} parent=1 // pred_region
      _
    $region21: #{tpu_custom_call.1} parent=1 // pred_fallthru
      _
    // Predicated region
    $region22: #{tpu_custom_call.1} parent=1 // pred_check
      _
    $region23: #{tpu_custom_call.1} parent=1 // pred_check_branch
      %63 = sbr.rel (0) target = $region25
    $region24: #{tpu_custom_call.1} parent=1 // pred_region
      %64 = dma.done [#allocation3], 256
    $region25: #{tpu_custom_call.1} parent=1 // pred_fallthru
      _
    // Predicated region
    $region26: #{tpu_custom_call.1} parent=1 // pred_check
      _
    $region27: #{tpu_custom_call.1} parent=1 // pred_check_branch
      %66 = sbr.rel (0) target = $region29
    $region28: #{tpu_custom_call.1} parent=1 // pred_region
      %67 = dma.done [#allocation6], 8192
    $region29: #{tpu_custom_call.1} parent=1 // pred_fallthru
      _
    // Predicated region
    $region30: #{tpu_custom_call.1} parent=1 // pred_check
      _
    $region31: #{tpu_custom_call.1} parent=1 // pred_check_branch
      %69 = sbr.rel (0) target = $region33
    $region32: #{tpu_custom_call.1} parent=1 // pred_region
      %70 = dma.done [#allocation6], 64
    $region33: #{tpu_custom_call.1} parent=1 // pred_fallthru
      _
    // Predicated region
    $region34: #{tpu_custom_call.1} parent=1 // pred_check
      _
    $region35: #{tpu_custom_call.1} parent=1 // pred_check_branch
      %72 = sbr.rel (0) target = $region37
    $region36: #{tpu_custom_call.1} parent=1 // pred_region
      %73 = dma.done [#allocation9], 8192
    $region37: #{tpu_custom_call.1} parent=1 // pred_fallthru
      _
    %v74 = vld [vmem:[#allocation2] sm:$0xff]
    %v75 = vld [vmem:[#allocation2 + $0x8] sm:$0xff]
    %v76 = vld [vmem:[#allocation5] sm:$0xff]
    %v77 = vld [vmem:[#allocation5 + $0x8] sm:$0xff]
    %v78 = vld [vmem:[#allocation5 + $0x10] sm:$0xff]
    %v79 = vld [vmem:[#allocation5 + $0x18] sm:$0xff]
    %v80 = vld [vmem:[#allocation5 + $0x20] sm:$0xff]
    %v81 = vld [vmem:[#allocation5 + $0x28] sm:$0xff]
    %v82 = vld [vmem:[#allocation5 + $0x30] sm:$0xff]
    %v83 = vld [vmem:[#allocation5 + $0x38] sm:$0xff]
    %v84 = vld [vmem:[#allocation5 + $0x40] sm:$0xff]
    %v85 = vld [vmem:[#allocation5 + $0x48] sm:$0xff]
    %v86 = vld [vmem:[#allocation5 + $0x50] sm:$0xff]
    %v87 = vld [vmem:[#allocation5 + $0x58] sm:$0xff]
    %v88 = vld [vmem:[#allocation5 + $0x60] sm:$0xff]
    %v89 = vld [vmem:[#allocation5 + $0x68] sm:$0xff]
    %v90 = vld [vmem:[#allocation5 + $0x70] sm:$0xff]
    %v91 = vld [vmem:[#allocation5 + $0x78] sm:$0xff]
    %v92 = vld [vmem:[#allocation5 + $0x80] sm:$0xff]
    %v93 = vld [vmem:[#allocation5 + $0x88] sm:$0xff]
    %v94 = vld [vmem:[#allocation5 + $0x90] sm:$0xff]
    %v95 = vld [vmem:[#allocation5 + $0x98] sm:$0xff]
    %v96 = vld [vmem:[#allocation5 + $0xa0] sm:$0xff]
    %v97 = vld [vmem:[#allocation5 + $0xa8] sm:$0xff]
    %v98 = vld [vmem:[#allocation5 + $0xb0] sm:$0xff]
    %v99 = vld [vmem:[#allocation5 + $0xb8] sm:$0xff]
    %v100 = vld [vmem:[#allocation5 + $0xc0] sm:$0xff]
    %v101 = vld [vmem:[#allocation5 + $0xc8] sm:$0xff]
    %v102 = vld [vmem:[#allocation5 + $0xd0] sm:$0xff]
    %v103 = vld [vmem:[#allocation5 + $0xd8] sm:$0xff]
    %v104 = vld [vmem:[#allocation5 + $0xe0] sm:$0xff]
    %v105 = vld [vmem:[#allocation5 + $0xe8] sm:$0xff]
    %v106 = vld [vmem:[#allocation5 + $0xf0] sm:$0xff]
    %v107 = vld [vmem:[#allocation5 + $0xf8] sm:$0xff]
    %v108 = vld [vmem:[#allocation5 + $0x100] sm:$0xff]
    %v109 = vld [vmem:[#allocation5 + $0x108] sm:$0xff]
    %v110 = vld [vmem:[#allocation5 + $0x110] sm:$0xff]
    %v111 = vld [vmem:[#allocation5 + $0x118] sm:$0xff]
    %v112 = vld [vmem:[#allocation5 + $0x120] sm:$0xff]
    %v113 = vld [vmem:[#allocation5 + $0x128] sm:$0xff]
    %v114 = vld [vmem:[#allocation5 + $0x130] sm:$0xff]
    %v115 = vld [vmem:[#allocation5 + $0x138] sm:$0xff]
    %v116 = vld [vmem:[#allocation5 + $0x140] sm:$0xff]
    %v117 = vld [vmem:[#allocation5 + $0x148] sm:$0xff]
    %v118 = vld [vmem:[#allocation5 + $0x150] sm:$0xff]
    %v119 = vld [vmem:[#allocation5 + $0x158] sm:$0xff]
    %v120 = vld [vmem:[#allocation5 + $0x160] sm:$0xff]
    %v121 = vld [vmem:[#allocation5 + $0x168] sm:$0xff]
    %v122 = vld [vmem:[#allocation5 + $0x170] sm:$0xff]
    %v123 = vld [vmem:[#allocation5 + $0x178] sm:$0xff]
    %v124 = vld [vmem:[#allocation5 + $0x180] sm:$0xff]
    %v125 = vld [vmem:[#allocation5 + $0x188] sm:$0xff]
    %v126 = vld [vmem:[#allocation5 + $0x190] sm:$0xff]
    %v127 = vld [vmem:[#allocation5 + $0x198] sm:$0xff]
    %v128 = vld [vmem:[#allocation5 + $0x1a0] sm:$0xff]
    %v129 = vld [vmem:[#allocation5 + $0x1a8] sm:$0xff]
    %v130 = vld [vmem:[#allocation5 + $0x1b0] sm:$0xff]
    %v131 = vld [vmem:[#allocation5 + $0x1b8] sm:$0xff]
    %v132 = vld [vmem:[#allocation5 + $0x1c0] sm:$0xff]
    %v133 = vld [vmem:[#allocation5 + $0x1c8] sm:$0xff]
    %v134 = vld [vmem:[#allocation5 + $0x1d0] sm:$0xff]
    %v135 = vld [vmem:[#allocation5 + $0x1d8] sm:$0xff]
    %v136 = vld [vmem:[#allocation5 + $0x1e0] sm:$0xff]
    %v137 = vld [vmem:[#allocation5 + $0x1e8] sm:$0xff]
    %v138 = vld [vmem:[#allocation5 + $0x1f0] sm:$0xff]
    %v139 = vld [vmem:[#allocation5 + $0x1f8] sm:$0xff]
    %v140 = vld [vmem:[#allocation7] sm:$0xf]
    %v142 = vlaneseq
    %v143 = vshrl.u32 %v142, 7
    %v144 = vsub.s32 0, %v143
    %v145 = vrot.slane %v140, %v144
    %v146 = vlaneseq
    %v147 = vshrl.u32 %v146, 7
    %v148 = vsub.s32 1, %v147
    %v149 = vrot.slane %v140, %v148
    %v150 = vlaneseq
    %v151 = vshrl.u32 %v150, 7
    %v152 = vsub.s32 2, %v151
    %v153 = vrot.slane %v140, %v152
    %v154 = vlaneseq
    %v155 = vshrl.u32 %v154, 7
    %v156 = vsub.s32 3, %v155
    %v157 = vrot.slane %v140, %v156
    %162 = vmatprep.subr.mxu0 %v137
    %163 = vmatpush1.msra.mxu0 %v136
    %164 = vmatprep.subr.mxu0 %v133
    %165 = vmatpush1.msra.mxu0 %v132
    %166 = vmatprep.subr.mxu0 %v129
    %167 = vmatpush1.msra.mxu0 %v128
    %168 = vmatprep.subr.mxu0 %v125
    %169 = vmatpush1.msra.mxu0 %v124
    %170 = vmatprep.subr.mxu0 %v121
    %171 = vmatpush1.msra.mxu0 %v120
    %172 = vmatprep.subr.mxu0 %v117
    %173 = vmatpush1.msra.mxu0 %v116
    %174 = vmatprep.subr.mxu0 %v113
    %175 = vmatpush1.msra.mxu0 %v112
    %176 = vmatprep.subr.mxu0 %v109
    %177 = vmatpush1.msra.mxu0 %v108
    %178 = vmatprep.subr.mxu0 %v105
    %179 = vmatpush1.msra.mxu0 %v104
    %180 = vmatprep.subr.mxu0 %v101
    %181 = vmatpush1.msra.mxu0 %v100
    %182 = vmatprep.subr.mxu0 %v97
    %183 = vmatpush1.msra.mxu0 %v96
    %184 = vmatprep.subr.mxu0 %v93
    %185 = vmatpush1.msra.mxu0 %v92
    %186 = vmatprep.subr.mxu0 %v89
    %187 = vmatpush1.msra.mxu0 %v88
    %188 = vmatprep.subr.mxu0 %v85
    %189 = vmatpush1.msra.mxu0 %v84
    %190 = vmatprep.subr.mxu0 %v81
    %191 = vmatpush1.msra.mxu0 %v80
    %192 = vmatprep.subr.mxu0 %v77
    %193 = vmatpush1.msra.mxu0 %v76
    %194 = vmatprep.subr.mxu0 0.0
    %195 = vmatpush2.msra.mxu0 0.0
    %196 = vmatprep.subr.mxu0 0.0
    %197 = vmatpush2.msra.mxu0 0.0
    %198 = vmatprep.subr.mxu0 0.0
    %199 = vmatpush2.msra.mxu0 0.0
    %200 = vmatprep.subr.mxu0 0.0
    %201 = vmatpush2.msra.mxu0 0.0
    %202 = vmatprep.subr.mxu0 0.0
    %203 = vmatpush2.msra.mxu0 0.0
    %204 = vmatprep.subr.mxu0 0.0
    %205 = vmatpush2.msra.mxu0 0.0
    %206 = vmatprep.subr.mxu0 0.0
    %207 = vmatpush2.msra.mxu0 0.0
    %208 = vmatprep.subr.mxu0 0.0
    %209 = vmatpush2.msra.mxu0 0.0
    %210 = vmatprep.subr.mxu0 0.0
    %211 = vmatpush2.msra.mxu0 0.0
    %212 = vmatprep.subr.mxu0 0.0
    %213 = vmatpush2.msra.mxu0 0.0
    %214 = vmatprep.subr.mxu0 0.0
    %215 = vmatpush2.msra.mxu0 0.0
    %216 = vmatprep.subr.mxu0 0.0
    %217 = vmatpush2.msra.mxu0 0.0
    %218 = vmatprep.subr.mxu0 0.0
    %219 = vmatpush2.msra.mxu0 0.0
    %220 = vmatprep.subr.mxu0 0.0
    %221 = vmatpush2.msra.mxu0 0.0
    %222 = vmatprep.subr.mxu0 0.0
    %223 = vmatpush2.msra.mxu0 0.0
    %224 = vmatprep.subr.mxu0 0.0
    %225 = vmatpush2.msra.mxu0 0.0
    %226 = vmatprep.mubr.f32.mxu0 0.0
    %227 = vmatmul.mubr.f32.gmra.mxu0 %v74
    %v228 = vpop.f32.mrf.mxu0
    %v229 = vadd.f32 %v145, %v228
    %v230 = vpop.f32.mrf.mxu0
    %v231 = vadd.f32 %v149, %v230
    %232 = vmatprep.mubr.f32.mxu0 0.0
    %233 = vmatmul.mubr.f32.gmra.mxu0 %v75
    %v234 = vpop.f32.mrf.mxu0
    %v235 = vadd.f32 %v145, %v234
    %v236 = vpop.f32.mrf.mxu0
    %v237 = vadd.f32 %v149, %v236
    %238 = vdwg.mxu0
    %239 = vmatprep.subr.mxu0 %v139
    %240 = vmatpush1.msra.mxu0 %v138
    %241 = vmatprep.subr.mxu0 %v135
    %242 = vmatpush1.msra.mxu0 %v134
    %243 = vmatprep.subr.mxu0 %v131
    %244 = vmatpush1.msra.mxu0 %v130
    %245 = vmatprep.subr.mxu0 %v127
    %246 = vmatpush1.msra.mxu0 %v126
    %247 = vmatprep.subr.mxu0 %v123
    %248 = vmatpush1.msra.mxu0 %v122
    %249 = vmatprep.subr.mxu0 %v119
    %250 = vmatpush1.msra.mxu0 %v118
    %251 = vmatprep.subr.mxu0 %v115
    %252 = vmatpush1.msra.mxu0 %v114
    %253 = vmatprep.subr.mxu0 %v111
    %254 = vmatpush1.msra.mxu0 %v110
    %255 = vmatprep.subr.mxu0 %v107
    %256 = vmatpush1.msra.mxu0 %v106
    %257 = vmatprep.subr.mxu0 %v103
    %258 = vmatpush1.msra.mxu0 %v102
    %259 = vmatprep.subr.mxu0 %v99
    %260 = vmatpush1.msra.mxu0 %v98
    %261 = vmatprep.subr.mxu0 %v95
    %262 = vmatpush1.msra.mxu0 %v94
    %263 = vmatprep.subr.mxu0 %v91
    %264 = vmatpush1.msra.mxu0 %v90
    %265 = vmatprep.subr.mxu0 %v87
    %266 = vmatpush1.msra.mxu0 %v86
    %267 = vmatprep.subr.mxu0 %v83
    %268 = vmatpush1.msra.mxu0 %v82
    %269 = vmatprep.subr.mxu0 %v79
    %270 = vmatpush1.msra.mxu0 %v78
    %271 = vmatprep.subr.mxu0 0.0
    %272 = vmatpush2.msra.mxu0 0.0
    %273 = vmatprep.subr.mxu0 0.0
    %274 = vmatpush2.msra.mxu0 0.0
    %275 = vmatprep.subr.mxu0 0.0
    %276 = vmatpush2.msra.mxu0 0.0
    %277 = vmatprep.subr.mxu0 0.0
    %278 = vmatpush2.msra.mxu0 0.0
    %279 = vmatprep.subr.mxu0 0.0
    %280 = vmatpush2.msra.mxu0 0.0
    %281 = vmatprep.subr.mxu0 0.0
    %282 = vmatpush2.msra.mxu0 0.0
    %283 = vmatprep.subr.mxu0 0.0
    %284 = vmatpush2.msra.mxu0 0.0
    %285 = vmatprep.subr.mxu0 0.0
    %286 = vmatpush2.msra.mxu0 0.0
    %287 = vmatprep.subr.mxu0 0.0
    %288 = vmatpush2.msra.mxu0 0.0
    %289 = vmatprep.subr.mxu0 0.0
    %290 = vmatpush2.msra.mxu0 0.0
    %291 = vmatprep.subr.mxu0 0.0
    %292 = vmatpush2.msra.mxu0 0.0
    %293 = vmatprep.subr.mxu0 0.0
    %294 = vmatpush2.msra.mxu0 0.0
    %295 = vmatprep.subr.mxu0 0.0
    %296 = vmatpush2.msra.mxu0 0.0
    %297 = vmatprep.subr.mxu0 0.0
    %298 = vmatpush2.msra.mxu0 0.0
    %299 = vmatprep.subr.mxu0 0.0
    %300 = vmatpush2.msra.mxu0 0.0
    %301 = vmatprep.subr.mxu0 0.0
    %302 = vmatpush2.msra.mxu0 0.0
    %303 = vmatprep.mubr.f32.mxu0 0.0
    %304 = vmatmul.mubr.f32.gmra.mxu0 %v74
    %v305 = vpop.f32.mrf.mxu0
    %v306 = vadd.f32 %v153, %v305
    %v307 = vpop.f32.mrf.mxu0
    %v308 = vadd.f32 %v157, %v307
    %309 = vmatprep.mubr.f32.mxu0 0.0
    %310 = vmatmul.mubr.f32.gmra.mxu0 %v75
    %v311 = vpop.f32.mrf.mxu0
    %v312 = vadd.f32 %v153, %v311
    %v313 = vpop.f32.mrf.mxu0
    %v314 = vadd.f32 %v157, %v313
    %315 = vdwg.mxu0
    %v316 = vmul.f32 %v229, %v229
    %v317 = vmul.f32 %v231, %v231
    %v318 = vmul.f32 %v306, %v306
    %v319 = vmul.f32 %v308, %v308
    %v320 = vmul.f32 %v235, %v235
    %v321 = vmul.f32 %v237, %v237
    %v322 = vmul.f32 %v312, %v312
    %v323 = vmul.f32 %v314, %v314
    %v324 = vmul.f32 %v316, 0.035677407
    %v325 = vmul.f32 %v317, 0.035677407
    %v326 = vmul.f32 %v318, 0.035677407
    %v327 = vmul.f32 %v319, 0.035677407
    %v328 = vmul.f32 %v320, 0.035677407
    %v329 = vmul.f32 %v321, 0.035677407
    %v330 = vmul.f32 %v322, 0.035677407
    %v331 = vmul.f32 %v323, 0.035677407
    %v332 = vadd.f32 %v324, 0.7978846
    %v333 = vadd.f32 %v325, 0.7978846
    %v334 = vadd.f32 %v326, 0.7978846
    %v335 = vadd.f32 %v327, 0.7978846
    %v336 = vadd.f32 %v328, 0.7978846
    %v337 = vadd.f32 %v329, 0.7978846
    %v338 = vadd.f32 %v330, 0.7978846
    %v339 = vadd.f32 %v331, 0.7978846
    %v340 = vmul.f32 %v229, %v332
    %v341 = vmul.f32 %v231, %v333
    %v342 = vmul.f32 %v306, %v334
    %v343 = vmul.f32 %v308, %v335
    %v344 = vmul.f32 %v235, %v336
    %v345 = vmul.f32 %v237, %v337
    %v346 = vmul.f32 %v312, %v338
    %v347 = vmul.f32 %v314, %v339
    %v348 = vmul.f32 %v229, 0.5
    %v349 = vmul.f32 %v231, 0.5
    %v350 = vmul.f32 %v306, 0.5
    %v351 = vmul.f32 %v308, 0.5
    %v352 = vmul.f32 %v235, 0.5
    %v353 = vmul.f32 %v237, 0.5
    %v354 = vmul.f32 %v312, 0.5
    %v355 = vmul.f32 %v314, 0.5
    %v356 = vtanh.pop %v340
    %v357 = vtanh.pop %v341
    %v358 = vtanh.pop %v342
    %v359 = vtanh.pop %v343
    %v360 = vtanh.pop %v344
    %v361 = vtanh.pop %v345
    %v362 = vtanh.pop %v346
    %v363 = vtanh.pop %v347
    %v364 = vadd.f32 %v356, 1.0
    %v365 = vadd.f32 %v357, 1.0
    %v366 = vadd.f32 %v358, 1.0
    %v367 = vadd.f32 %v359, 1.0
    %v368 = vadd.f32 %v360, 1.0
    %v369 = vadd.f32 %v361, 1.0
    %v370 = vadd.f32 %v362, 1.0
    %v371 = vadd.f32 %v363, 1.0
    %v372 = vmul.f32 %v348, %v364
    %v373 = vmul.f32 %v349, %v365
    %v374 = vmul.f32 %v350, %v366
    %v375 = vmul.f32 %v351, %v367
    %v376 = vmul.f32 %v352, %v368
    %v377 = vmul.f32 %v353, %v369
    %v378 = vmul.f32 %v354, %v370
    %v379 = vmul.f32 %v355, %v371
    %v380 = vld [vmem:[#allocation8] sm:$0xff]
    %v381 = vld [vmem:[#allocation8 + $0x8] sm:$0xff]
    %v382 = vld [vmem:[#allocation8 + $0x10] sm:$0xff]
    %v383 = vld [vmem:[#allocation8 + $0x18] sm:$0xff]
    %v384 = vld [vmem:[#allocation8 + $0x20] sm:$0xff]
    %v385 = vld [vmem:[#allocation8 + $0x28] sm:$0xff]
    %v386 = vld [vmem:[#allocation8 + $0x30] sm:$0xff]
    %v387 = vld [vmem:[#allocation8 + $0x38] sm:$0xff]
    %v388 = vld [vmem:[#allocation8 + $0x40] sm:$0xff]
    %v389 = vld [vmem:[#allocation8 + $0x48] sm:$0xff]
    %v390 = vld [vmem:[#allocation8 + $0x50] sm:$0xff]
    %v391 = vld [vmem:[#allocation8 + $0x58] sm:$0xff]
    %v392 = vld [vmem:[#allocation8 + $0x60] sm:$0xff]
    %v393 = vld [vmem:[#allocation8 + $0x68] sm:$0xff]
    %v394 = vld [vmem:[#allocation8 + $0x70] sm:$0xff]
    %v395 = vld [vmem:[#allocation8 + $0x78] sm:$0xff]
    %v396 = vld [vmem:[#allocation8 + $0x80] sm:$0xff]
    %v397 = vld [vmem:[#allocation8 + $0x88] sm:$0xff]
    %v398 = vld [vmem:[#allocation8 + $0x90] sm:$0xff]
    %v399 = vld [vmem:[#allocation8 + $0x98] sm:$0xff]
    %v400 = vld [vmem:[#allocation8 + $0xa0] sm:$0xff]
    %v401 = vld [vmem:[#allocation8 + $0xa8] sm:$0xff]
    %v402 = vld [vmem:[#allocation8 + $0xb0] sm:$0xff]
    %v403 = vld [vmem:[#allocation8 + $0xb8] sm:$0xff]
    %v404 = vld [vmem:[#allocation8 + $0xc0] sm:$0xff]
    %v405 = vld [vmem:[#allocation8 + $0xc8] sm:$0xff]
    %v406 = vld [vmem:[#allocation8 + $0xd0] sm:$0xff]
    %v407 = vld [vmem:[#allocation8 + $0xd8] sm:$0xff]
    %v408 = vld [vmem:[#allocation8 + $0xe0] sm:$0xff]
    %v409 = vld [vmem:[#allocation8 + $0xe8] sm:$0xff]
    %v410 = vld [vmem:[#allocation8 + $0xf0] sm:$0xff]
    %v411 = vld [vmem:[#allocation8 + $0xf8] sm:$0xff]
    %v412 = vld [vmem:[#allocation8 + $0x100] sm:$0xff]
    %v413 = vld [vmem:[#allocation8 + $0x108] sm:$0xff]
    %v414 = vld [vmem:[#allocation8 + $0x110] sm:$0xff]
    %v415 = vld [vmem:[#allocation8 + $0x118] sm:$0xff]
    %v416 = vld [vmem:[#allocation8 + $0x120] sm:$0xff]
    %v417 = vld [vmem:[#allocation8 + $0x128] sm:$0xff]
    %v418 = vld [vmem:[#allocation8 + $0x130] sm:$0xff]
    %v419 = vld [vmem:[#allocation8 + $0x138] sm:$0xff]
    %v420 = vld [vmem:[#allocation8 + $0x140] sm:$0xff]
    %v421 = vld [vmem:[#allocation8 + $0x148] sm:$0xff]
    %v422 = vld [vmem:[#allocation8 + $0x150] sm:$0xff]
    %v423 = vld [vmem:[#allocation8 + $0x158] sm:$0xff]
    %v424 = vld [vmem:[#allocation8 + $0x160] sm:$0xff]
    %v425 = vld [vmem:[#allocation8 + $0x168] sm:$0xff]
    %v426 = vld [vmem:[#allocation8 + $0x170] sm:$0xff]
    %v427 = vld [vmem:[#allocation8 + $0x178] sm:$0xff]
    %v428 = vld [vmem:[#allocation8 + $0x180] sm:$0xff]
    %v429 = vld [vmem:[#allocation8 + $0x188] sm:$0xff]
    %v430 = vld [vmem:[#allocation8 + $0x190] sm:$0xff]
    %v431 = vld [vmem:[#allocation8 + $0x198] sm:$0xff]
    %v432 = vld [vmem:[#allocation8 + $0x1a0] sm:$0xff]
    %v433 = vld [vmem:[#allocation8 + $0x1a8] sm:$0xff]
    %v434 = vld [vmem:[#allocation8 + $0x1b0] sm:$0xff]
    %v435 = vld [vmem:[#allocation8 + $0x1b8] sm:$0xff]
    %v436 = vld [vmem:[#allocation8 + $0x1c0] sm:$0xff]
    %v437 = vld [vmem:[#allocation8 + $0x1c8] sm:$0xff]
    %v438 = vld [vmem:[#allocation8 + $0x1d0] sm:$0xff]
    %v439 = vld [vmem:[#allocation8 + $0x1d8] sm:$0xff]
    %v440 = vld [vmem:[#allocation8 + $0x1e0] sm:$0xff]
    %v441 = vld [vmem:[#allocation8 + $0x1e8] sm:$0xff]
    %v442 = vld [vmem:[#allocation8 + $0x1f0] sm:$0xff]
    %v443 = vld [vmem:[#allocation8 + $0x1f8] sm:$0xff]
    %v444 = vld [vmem:[%s4] sm:$0x1]
    %v446 = vlaneseq
    %v447 = vshrl.u32 %v446, 7
    %v448 = vsub.s32 0, %v447
    %v449 = vrot.slane %v444, %v448
    %451 = vmatprep.subr.mxu0 0.0
    %452 = vmatpush1.msra.mxu0 %v395
    %453 = vmatprep.subr.mxu0 0.0
    %454 = vmatpush1.msra.mxu0 %v394
    %455 = vmatprep.subr.mxu0 0.0
    %456 = vmatpush1.msra.mxu0 %v393
    %457 = vmatprep.subr.mxu0 0.0
    %458 = vmatpush1.msra.mxu0 %v392
    %459 = vmatprep.subr.mxu0 0.0
    %460 = vmatpush1.msra.mxu0 %v391
    %461 = vmatprep.subr.mxu0 0.0
    %462 = vmatpush1.msra.mxu0 %v390
    %463 = vmatprep.subr.mxu0 0.0
    %464 = vmatpush1.msra.mxu0 %v389
    %465 = vmatprep.subr.mxu0 0.0
    %466 = vmatpush1.msra.mxu0 %v388
    %467 = vmatprep.subr.mxu0 0.0
    %468 = vmatpush1.msra.mxu0 %v387
    %469 = vmatprep.subr.mxu0 0.0
    %470 = vmatpush1.msra.mxu0 %v386
    %471 = vmatprep.subr.mxu0 0.0
    %472 = vmatpush1.msra.mxu0 %v385
    %473 = vmatprep.subr.mxu0 0.0
    %474 = vmatpush1.msra.mxu0 %v384
    %475 = vmatprep.subr.mxu0 0.0
    %476 = vmatpush1.msra.mxu0 %v383
    %477 = vmatprep.subr.mxu0 0.0
    %478 = vmatpush1.msra.mxu0 %v382
    %479 = vmatprep.subr.mxu0 0.0
    %480 = vmatpush1.msra.mxu0 %v381
    %481 = vmatprep.subr.mxu0 0.0
    %482 = vmatpush1.msra.mxu0 %v380
    %483 = vmatprep.subr.mxu0 0.0
    %484 = vmatpush2.msra.mxu0 %v411
    %485 = vmatprep.subr.mxu0 0.0
    %486 = vmatpush2.msra.mxu0 %v410
    %487 = vmatprep.subr.mxu0 0.0
    %488 = vmatpush2.msra.mxu0 %v409
    %489 = vmatprep.subr.mxu0 0.0
    %490 = vmatpush2.msra.mxu0 %v408
    %491 = vmatprep.subr.mxu0 0.0
    %492 = vmatpush2.msra.mxu0 %v407
    %493 = vmatprep.subr.mxu0 0.0
    %494 = vmatpush2.msra.mxu0 %v406
    %495 = vmatprep.subr.mxu0 0.0
    %496 = vmatpush2.msra.mxu0 %v405
    %497 = vmatprep.subr.mxu0 0.0
    %498 = vmatpush2.msra.mxu0 %v404
    %499 = vmatprep.subr.mxu0 0.0
    %500 = vmatpush2.msra.mxu0 %v403
    %501 = vmatprep.subr.mxu0 0.0
    %502 = vmatpush2.msra.mxu0 %v402
    %503 = vmatprep.subr.mxu0 0.0
    %504 = vmatpush2.msra.mxu0 %v401
    %505 = vmatprep.subr.mxu0 0.0
    %506 = vmatpush2.msra.mxu0 %v400
    %507 = vmatprep.subr.mxu0 0.0
    %508 = vmatpush2.msra.mxu0 %v399
    %509 = vmatprep.subr.mxu0 0.0
    %510 = vmatpush2.msra.mxu0 %v398
    %511 = vmatprep.subr.mxu0 0.0
    %512 = vmatpush2.msra.mxu0 %v397
    %513 = vmatprep.subr.mxu0 0.0
    %514 = vmatpush2.msra.mxu0 %v396
    %515 = vmatprep.mubr.f32.mxu0 %v373
    %516 = vmatmul.mubr.f32.gmra.mxu0 %v372
    %v517 = vpop.f32.mrf.mxu0
    %v518 = vadd.f32 %v449, %v517
    %v519 = vpop.f32.mrf.mxu0
    %520 = vmatprep.mubr.f32.mxu0 %v377
    %521 = vmatmul.mubr.f32.gmra.mxu0 %v376
    %v522 = vpop.f32.mrf.mxu0
    %v523 = vadd.f32 %v449, %v522
    %v524 = vpop.f32.mrf.mxu0
    %525 = vdwg.mxu0
    %526 = vmatprep.subr.mxu0 0.0
    %527 = vmatpush1.msra.mxu0 %v427
    %528 = vmatprep.subr.mxu0 0.0
    %529 = vmatpush1.msra.mxu0 %v426
    %530 = vmatprep.subr.mxu0 0.0
    %531 = vmatpush1.msra.mxu0 %v425
    %532 = vmatprep.subr.mxu0 0.0
    %533 = vmatpush1.msra.mxu0 %v424
    %534 = vmatprep.subr.mxu0 0.0
    %535 = vmatpush1.msra.mxu0 %v423
    %536 = vmatprep.subr.mxu0 0.0
    %537 = vmatpush1.msra.mxu0 %v422
    %538 = vmatprep.subr.mxu0 0.0
    %539 = vmatpush1.msra.mxu0 %v421
    %540 = vmatprep.subr.mxu0 0.0
    %541 = vmatpush1.msra.mxu0 %v420
    %542 = vmatprep.subr.mxu0 0.0
    %543 = vmatpush1.msra.mxu0 %v419
    %544 = vmatprep.subr.mxu0 0.0
    %545 = vmatpush1.msra.mxu0 %v418
    %546 = vmatprep.subr.mxu0 0.0
    %547 = vmatpush1.msra.mxu0 %v417
    %548 = vmatprep.subr.mxu0 0.0
    %549 = vmatpush1.msra.mxu0 %v416
    %550 = vmatprep.subr.mxu0 0.0
    %551 = vmatpush1.msra.mxu0 %v415
    %552 = vmatprep.subr.mxu0 0.0
    %553 = vmatpush1.msra.mxu0 %v414
    %554 = vmatprep.subr.mxu0 0.0
    %555 = vmatpush1.msra.mxu0 %v413
    %556 = vmatprep.subr.mxu0 0.0
    %557 = vmatpush1.msra.mxu0 %v412
    %558 = vmatprep.subr.mxu0 0.0
    %559 = vmatpush2.msra.mxu0 %v443
    %560 = vmatprep.subr.mxu0 0.0
    %561 = vmatpush2.msra.mxu0 %v442
    %562 = vmatprep.subr.mxu0 0.0
    %563 = vmatpush2.msra.mxu0 %v441
    %564 = vmatprep.subr.mxu0 0.0
    %565 = vmatpush2.msra.mxu0 %v440
    %566 = vmatprep.subr.mxu0 0.0
    %567 = vmatpush2.msra.mxu0 %v439
    %568 = vmatprep.subr.mxu0 0.0
    %569 = vmatpush2.msra.mxu0 %v438
    %570 = vmatprep.subr.mxu0 0.0
    %571 = vmatpush2.msra.mxu0 %v437
    %572 = vmatprep.subr.mxu0 0.0
    %573 = vmatpush2.msra.mxu0 %v436
    %574 = vmatprep.subr.mxu0 0.0
    %575 = vmatpush2.msra.mxu0 %v435
    %576 = vmatprep.subr.mxu0 0.0
    %577 = vmatpush2.msra.mxu0 %v434
    %578 = vmatprep.subr.mxu0 0.0
    %579 = vmatpush2.msra.mxu0 %v433
    %580 = vmatprep.subr.mxu0 0.0
    %581 = vmatpush2.msra.mxu0 %v432
    %582 = vmatprep.subr.mxu0 0.0
    %583 = vmatpush2.msra.mxu0 %v431
    %584 = vmatprep.subr.mxu0 0.0
    %585 = vmatpush2.msra.mxu0 %v430
    %586 = vmatprep.subr.mxu0 0.0
    %587 = vmatpush2.msra.mxu0 %v429
    %588 = vmatprep.subr.mxu0 0.0
    %589 = vmatpush2.msra.mxu0 %v428
    %590 = vmatprep.mubr.f32.mxu0 %v375
    %591 = vmatmul.mubr.f32.gmra.mxu0 %v374
    %v592 = vpop.f32.mrf.mxu0
    %v593 = vadd.f32 %v518, %v592
    %v594 = vpop.f32.mrf.mxu0
    %595 = vmatprep.mubr.f32.mxu0 %v379
    %596 = vmatmul.mubr.f32.gmra.mxu0 %v378
    %v597 = vpop.f32.mrf.mxu0
    %v598 = vadd.f32 %v523, %v597
    %v599 = vpop.f32.mrf.mxu0
    %600 = vdwg.mxu0
    %601 = vst [vmem:[#allocation10] sm:$0xff] %v593
    %602 = vst [vmem:[#allocation10 + $0x8] sm:$0xff] %v598
    // Predicated region
    $region38: #{tpu_custom_call.1} parent=1 // pred_check
      _
    $region39: #{tpu_custom_call.1} parent=1 // pred_check_branch
      %604 = sbr.rel (0) target = $region41
    $region40: #{tpu_custom_call.1} parent=1 // pred_region
      %s606 = ssub.s32 256, 256
      %607 = vsyncadd [#allocation4], %s606
      %s608 = sshll.u32 [#allocation10], 4
      %s609 = int_to_ptr.vmem [resolvable:$true] %s608
      %614 = dma.vmem_to_hbm [thread:$0]  %s609, 256, %s5, [#allocation4], 128, 128, 8
    $region41: #{tpu_custom_call.1} parent=1 // pred_fallthru
      _
    // Predicated region
    $region42: #{tpu_custom_call.1} parent=1 // pred_check
      _
    $region43: #{tpu_custom_call.1} parent=1 // pred_check_branch
      %616 = sbr.rel (0) target = $region45
    $region44: #{tpu_custom_call.1} parent=1 // pred_region
      %617 = dma.done [#allocation4], 256
    $region45: #{tpu_custom_call.1} parent=1 // pred_fallthru
      _
    %618 = vsyncpa [#allocation3], 1
    %619 = vsyncpa [#allocation6], 1
    %620 = vsyncpa [#allocation9], 1
    %621 = vsyncpa [#allocation4], 1

// kernel: tpu_custom_call.1
$region0: #{tpu_custom_call.1}
  #allocation0 [shape = 'u32[]', space=smem, size = 0x4, offset = 0x4, fixed_abs, tag = 'smem constant byte address 0x4 - core index']
  #allocation1 [shape = 'u32[144,128]{1,0:T(1,128)}', space=vmem, size = 0x12000, scoped, tag = 'internal scratch']
  %s0 = inlined_call_operand.hbm [shape: f32[16,128], index: 0, kind: input, shape index: {}]
  %s1 = inlined_call_operand.hbm [shape: f32[128,512], index: 1, kind: input, shape index: {}]
  %s2 = inlined_call_operand.hbm [shape: f32[1,512], index: 2, kind: input, shape index: {}]
  %s3 = inlined_call_operand.hbm [shape: f32[512,128], index: 3, kind: input, shape index: {}]
  %s4 = inlined_call_operand.vmem [shape: f32[1,128], index: 4, kind: input, shape index: {}]
  %s5 = inlined_call_operand.hbm [shape: f32[16,128], index: 5, kind: output, shape index: {}]
  %s6 = sld [smem:[#allocation0]]
  $region46: #{tpu_custom_call.1} parent=0
    _
  %s8 = ssub.s32 1, %s6
  %s9 = scalar_select 0, %s8, %s6
  $region1: #{tpu_custom_call.1} parent=0
    #allocation2 [shape = 'u8[8192]{0}', space=vmem, size = 0x2000, scoped, tag = 'input window, operand 0, single buffered']
    #allocation3 [shape = 's32[1]{0}', space=sflag, size = 0x4, scoped, tag = 'scoped memory for tpu_custom_call.1']
    #allocation4 [shape = 's32[1]{0}', space=sflag, size = 0x4, scoped, tag = 'scoped memory for tpu_custom_call.1']
    #allocation5 [shape = 'u8[262144]{0}', space=vmem, size = 0x40000, scoped, tag = 'input window, operand 1, single buffered']
    #allocation6 [shape = 's32[1]{0}', space=sflag, size = 0x4, scoped, tag = 'scoped memory for tpu_custom_call.1']
    #allocation7 [shape = 'u8[2048]{0}', space=vmem, size = 0x800, scoped, tag = 'input window, operand 2, single buffered']
    #allocation8 [shape = 'u8[262144]{0}', space=vmem, size = 0x40000, scoped, tag = 'input window, operand 3, single buffered']
    #allocation9 [shape = 's32[1]{0}', space=sflag, size = 0x4, scoped, tag = 'scoped memory for tpu_custom_call.1']
    #allocation10 [shape = 'u8[8192]{0}', space=vmem, size = 0x2000, scoped, tag = 'output window, operand 0, single buffered']
    %10 = vsyncpa [#allocation3], 0
    %11 = vsyncpa [#allocation6], 0
    %12 = vsyncpa [#allocation9], 0
    %13 = vsyncpa [#allocation4], 0
    // Predicated region
    $region2: #{tpu_custom_call.1} parent=1 // pred_check
      _
    $region3: #{tpu_custom_call.1} parent=1 // pred_check_branch
      %15 = sbr.rel (0) target = $region5
    $region4: #{tpu_custom_call.1} parent=1 // pred_region
      %s17 = ssub.s32 256, 256
      %18 = vsyncadd [#allocation3], %s17
      %s19 = sshll.u32 [#allocation2], 4
      %s20 = int_to_ptr.vmem [resolvable:$true] %s19
      %25 = dma.hbm_to_vmem [thread:$0]  %s0, 256, %s20, [#allocation3], 128, 128, 8
    $region5: #{tpu_custom_call.1} parent=1 // pred_fallthru
      _
    // Predicated region
    $region6: #{tpu_custom_call.1} parent=1 // pred_check
      _
    $region7: #{tpu_custom_call.1} parent=1 // pred_check_branch
      %27 = sbr.rel (0) target = $region9
    $region8: #{tpu_custom_call.1} parent=1 // pred_region
      %s29 = ssub.s32 8192, 8192
      %30 = vsyncadd [#allocation6], %s29
      %s31 = sshll.u32 [#allocation5], 4
      %s32 = int_to_ptr.vmem [resolvable:$true] %s31
      %37 = dma.hbm_to_vmem [thread:$0]  %s1, 8192, %s32, [#allocation6], 512, 512, 32
    $region9: #{tpu_custom_call.1} parent=1 // pred_fallthru
      _
    // Predicated region
    $region10: #{tpu_custom_call.1} parent=1 // pred_check
      _
    $region11: #{tpu_custom_call.1} parent=1 // pred_check_branch
      %39 = sbr.rel (0) target = $region13
    $region12: #{tpu_custom_call.1} parent=1 // pred_region
      %s41 = ssub.s32 64, 64
      %42 = vsyncadd [#allocation6], %s41
      %s44 = sshll.u32 [#allocation7], 4
      %s45 = int_to_ptr.vmem [resolvable:$true] %s44
      %47 = dma.hbm_to_vmem [thread:$0]  %s2, 64, %s45, [#allocation6]
    $region13: #{tpu_custom_call.1} parent=1 // pred_fallthru
      _
    // Predicated region
    $region14: #{tpu_custom_call.1} parent=1 // pred_check
      _
    $region15: #{tpu_custom_call.1} parent=1 // pred_check_branch
      %49 = sbr.rel (0) target = $region17
    $region16: #{tpu_custom_call.1} parent=1 // pred_region
      %s51 = ssub.s32 8192, 8192
      %52 = vsyncadd [#allocation9], %s51
      %s53 = sshll.u32 [#allocation8], 4
      %s54 = int_to_ptr.vmem [resolvable:$true] %s53
      %59 = dma.hbm_to_vmem [thread:$0]  %s3, 8192, %s54, [#allocation9], 128, 128, 8
    $region17: #{tpu_custom_call.1} parent=1 // pred_fallthru
      _
    // Predicated region
    $region18: #{tpu_custom_call.1} parent=1 // pred_check
      _
    $region19: #{tpu_custom_call.1} parent=1 // pred_check_branch
      %61 = sbr.rel (0) target = $region21
    $region20: #{tpu_custom_call.1} parent=1 // pred_region
      _
    $region21: #{tpu_custom_call.1} parent=1 // pred_fallthru
      _
    // Predicated region
    $region22: #{tpu_custom_call.1} parent=1 // pred_check
      _
    $region23: #{tpu_custom_call.1} parent=1 // pred_check_branch
      %63 = sbr.rel (0) target = $region25
    $region24: #{tpu_custom_call.1} parent=1 // pred_region
      %64 = dma.done [#allocation3], 256
    $region25: #{tpu_custom_call.1} parent=1 // pred_fallthru
      _
    // Predicated region
    $region26: #{tpu_custom_call.1} parent=1 // pred_check
      _
    $region27: #{tpu_custom_call.1} parent=1 // pred_check_branch
      %66 = sbr.rel (0) target = $region29
    $region28: #{tpu_custom_call.1} parent=1 // pred_region
      %67 = dma.done [#allocation6], 8192
    $region29: #{tpu_custom_call.1} parent=1 // pred_fallthru
      _
    // Predicated region
    $region30: #{tpu_custom_call.1} parent=1 // pred_check
      _
    $region31: #{tpu_custom_call.1} parent=1 // pred_check_branch
      %69 = sbr.rel (0) target = $region33
    $region32: #{tpu_custom_call.1} parent=1 // pred_region
      %70 = dma.done [#allocation6], 64
    $region33: #{tpu_custom_call.1} parent=1 // pred_fallthru
      _
    // Predicated region
    $region34: #{tpu_custom_call.1} parent=1 // pred_check
      _
    $region35: #{tpu_custom_call.1} parent=1 // pred_check_branch
      %72 = sbr.rel (0) target = $region37
    $region36: #{tpu_custom_call.1} parent=1 // pred_region
      %73 = dma.done [#allocation9], 8192
    $region37: #{tpu_custom_call.1} parent=1 // pred_fallthru
      _
    %v74 = vld [vmem:[#allocation2] sm:$0xff]
    %v75 = vld [vmem:[#allocation2 + $0x8] sm:$0xff]
    %v76 = vld [vmem:[#allocation5] sm:$0xff]
    %v77 = vld [vmem:[#allocation5 + $0x8] sm:$0xff]
    %v78 = vld [vmem:[#allocation5 + $0x10] sm:$0xff]
    %v79 = vld [vmem:[#allocation5 + $0x18] sm:$0xff]
    %v80 = vld [vmem:[#allocation5 + $0x20] sm:$0xff]
    %v81 = vld [vmem:[#allocation5 + $0x28] sm:$0xff]
    %v82 = vld [vmem:[#allocation5 + $0x30] sm:$0xff]
    %v83 = vld [vmem:[#allocation5 + $0x38] sm:$0xff]
    %v84 = vld [vmem:[#allocation5 + $0x40] sm:$0xff]
    %v85 = vld [vmem:[#allocation5 + $0x48] sm:$0xff]
    %v86 = vld [vmem:[#allocation5 + $0x50] sm:$0xff]
    %v87 = vld [vmem:[#allocation5 + $0x58] sm:$0xff]
    %v88 = vld [vmem:[#allocation5 + $0x60] sm:$0xff]
    %v89 = vld [vmem:[#allocation5 + $0x68] sm:$0xff]
    %v90 = vld [vmem:[#allocation5 + $0x70] sm:$0xff]
    %v91 = vld [vmem:[#allocation5 + $0x78] sm:$0xff]
    %v92 = vld [vmem:[#allocation5 + $0x80] sm:$0xff]
    %v93 = vld [vmem:[#allocation5 + $0x88] sm:$0xff]
    %v94 = vld [vmem:[#allocation5 + $0x90] sm:$0xff]
    %v95 = vld [vmem:[#allocation5 + $0x98] sm:$0xff]
    %v96 = vld [vmem:[#allocation5 + $0xa0] sm:$0xff]
    %v97 = vld [vmem:[#allocation5 + $0xa8] sm:$0xff]
    %v98 = vld [vmem:[#allocation5 + $0xb0] sm:$0xff]
    %v99 = vld [vmem:[#allocation5 + $0xb8] sm:$0xff]
    %v100 = vld [vmem:[#allocation5 + $0xc0] sm:$0xff]
    %v101 = vld [vmem:[#allocation5 + $0xc8] sm:$0xff]
    %v102 = vld [vmem:[#allocation5 + $0xd0] sm:$0xff]
    %v103 = vld [vmem:[#allocation5 + $0xd8] sm:$0xff]
    %v104 = vld [vmem:[#allocation5 + $0xe0] sm:$0xff]
    %v105 = vld [vmem:[#allocation5 + $0xe8] sm:$0xff]
    %v106 = vld [vmem:[#allocation5 + $0xf0] sm:$0xff]
    %v107 = vld [vmem:[#allocation5 + $0xf8] sm:$0xff]
    %v108 = vld [vmem:[#allocation5 + $0x100] sm:$0xff]
    %v109 = vld [vmem:[#allocation5 + $0x108] sm:$0xff]
    %v110 = vld [vmem:[#allocation5 + $0x110] sm:$0xff]
    %v111 = vld [vmem:[#allocation5 + $0x118] sm:$0xff]
    %v112 = vld [vmem:[#allocation5 + $0x120] sm:$0xff]
    %v113 = vld [vmem:[#allocation5 + $0x128] sm:$0xff]
    %v114 = vld [vmem:[#allocation5 + $0x130] sm:$0xff]
    %v115 = vld [vmem:[#allocation5 + $0x138] sm:$0xff]
    %v116 = vld [vmem:[#allocation5 + $0x140] sm:$0xff]
    %v117 = vld [vmem:[#allocation5 + $0x148] sm:$0xff]
    %v118 = vld [vmem:[#allocation5 + $0x150] sm:$0xff]
    %v119 = vld [vmem:[#allocation5 + $0x158] sm:$0xff]
    %v120 = vld [vmem:[#allocation5 + $0x160] sm:$0xff]
    %v121 = vld [vmem:[#allocation5 + $0x168] sm:$0xff]
    %v122 = vld [vmem:[#allocation5 + $0x170] sm:$0xff]
    %v123 = vld [vmem:[#allocation5 + $0x178] sm:$0xff]
    %v124 = vld [vmem:[#allocation5 + $0x180] sm:$0xff]
    %v125 = vld [vmem:[#allocation5 + $0x188] sm:$0xff]
    %v126 = vld [vmem:[#allocation5 + $0x190] sm:$0xff]
    %v127 = vld [vmem:[#allocation5 + $0x198] sm:$0xff]
    %v128 = vld [vmem:[#allocation5 + $0x1a0] sm:$0xff]
    %v129 = vld [vmem:[#allocation5 + $0x1a8] sm:$0xff]
    %v130 = vld [vmem:[#allocation5 + $0x1b0] sm:$0xff]
    %v131 = vld [vmem:[#allocation5 + $0x1b8] sm:$0xff]
    %v132 = vld [vmem:[#allocation5 + $0x1c0] sm:$0xff]
    %v133 = vld [vmem:[#allocation5 + $0x1c8] sm:$0xff]
    %v134 = vld [vmem:[#allocation5 + $0x1d0] sm:$0xff]
    %v135 = vld [vmem:[#allocation5 + $0x1d8] sm:$0xff]
    %v136 = vld [vmem:[#allocation5 + $0x1e0] sm:$0xff]
    %v137 = vld [vmem:[#allocation5 + $0x1e8] sm:$0xff]
    %v138 = vld [vmem:[#allocation5 + $0x1f0] sm:$0xff]
    %v139 = vld [vmem:[#allocation5 + $0x1f8] sm:$0xff]
    %v140 = vld [vmem:[#allocation7] sm:$0xf]
    %v142 = vlaneseq
    %v143 = vshrl.u32 %v142, 7
    %v144 = vsub.s32 0, %v143
    %v145 = vrot.slane %v140, %v144
    %v146 = vlaneseq
    %v147 = vshrl.u32 %v146, 7
    %v148 = vsub.s32 1, %v147
    %v149 = vrot.slane %v140, %v148
    %v150 = vlaneseq
    %v151 = vshrl.u32 %v150, 7
    %v152 = vsub.s32 2, %v151
    %v153 = vrot.slane %v140, %v152
    %v154 = vlaneseq
    %v155 = vshrl.u32 %v154, 7
    %v156 = vsub.s32 3, %v155
    %v157 = vrot.slane %v140, %v156
    %162 = vmatprep.subr.mxu0 %v137
    %163 = vmatpush1.msra.mxu0 %v136
    %164 = vmatprep.subr.mxu0 %v133
    %165 = vmatpush1.msra.mxu0 %v132
    %166 = vmatprep.subr.mxu0 %v129
    %167 = vmatpush1.msra.mxu0 %v128
    %168 = vmatprep.subr.mxu0 %v125
    %169 = vmatpush1.msra.mxu0 %v124
    %170 = vmatprep.subr.mxu0 %v121
    %171 = vmatpush1.msra.mxu0 %v120
    %172 = vmatprep.subr.mxu0 %v117
    %173 = vmatpush1.msra.mxu0 %v116
    %174 = vmatprep.subr.mxu0 %v113
    %175 = vmatpush1.msra.mxu0 %v112
    %176 = vmatprep.subr.mxu0 %v109
    %177 = vmatpush1.msra.mxu0 %v108
    %178 = vmatprep.subr.mxu0 %v105
    %179 = vmatpush1.msra.mxu0 %v104
    %180 = vmatprep.subr.mxu0 %v101
    %181 = vmatpush1.msra.mxu0 %v100
    %182 = vmatprep.subr.mxu0 %v97
    %183 = vmatpush1.msra.mxu0 %v96
    %184 = vmatprep.subr.mxu0 %v93
    %185 = vmatpush1.msra.mxu0 %v92
    %186 = vmatprep.subr.mxu0 %v89
    %187 = vmatpush1.msra.mxu0 %v88
    %188 = vmatprep.subr.mxu0 %v85
    %189 = vmatpush1.msra.mxu0 %v84
    %190 = vmatprep.subr.mxu0 %v81
    %191 = vmatpush1.msra.mxu0 %v80
    %192 = vmatprep.subr.mxu0 %v77
    %193 = vmatpush1.msra.mxu0 %v76
    %194 = vmatprep.subr.mxu0 0.0
    %195 = vmatpush2.msra.mxu0 0.0
    %196 = vmatprep.subr.mxu0 0.0
    %197 = vmatpush2.msra.mxu0 0.0
    %198 = vmatprep.subr.mxu0 0.0
    %199 = vmatpush2.msra.mxu0 0.0
    %200 = vmatprep.subr.mxu0 0.0
    %201 = vmatpush2.msra.mxu0 0.0
    %202 = vmatprep.subr.mxu0 0.0
    %203 = vmatpush2.msra.mxu0 0.0
    %204 = vmatprep.subr.mxu0 0.0
    %205 = vmatpush2.msra.mxu0 0.0
    %206 = vmatprep.subr.mxu0 0.0
    %207 = vmatpush2.msra.mxu0 0.0
    %208 = vmatprep.subr.mxu0 0.0
    %209 = vmatpush2.msra.mxu0 0.0
    %210 = vmatprep.subr.mxu0 0.0
    %211 = vmatpush2.msra.mxu0 0.0
    %212 = vmatprep.subr.mxu0 0.0
    %213 = vmatpush2.msra.mxu0 0.0
    %214 = vmatprep.subr.mxu0 0.0
    %215 = vmatpush2.msra.mxu0 0.0
    %216 = vmatprep.subr.mxu0 0.0
    %217 = vmatpush2.msra.mxu0 0.0
    %218 = vmatprep.subr.mxu0 0.0
    %219 = vmatpush2.msra.mxu0 0.0
    %220 = vmatprep.subr.mxu0 0.0
    %221 = vmatpush2.msra.mxu0 0.0
    %222 = vmatprep.subr.mxu0 0.0
    %223 = vmatpush2.msra.mxu0 0.0
    %224 = vmatprep.subr.mxu0 0.0
    %225 = vmatpush2.msra.mxu0 0.0
    %226 = vmatprep.mubr.f32.mxu0 0.0
    %227 = vmatmul.mubr.f32.gmra.mxu0 %v74
    %v228 = vpop.f32.mrf.mxu0
    %v229 = vadd.f32 %v145, %v228
    %v230 = vpop.f32.mrf.mxu0
    %v231 = vadd.f32 %v149, %v230
    %232 = vmatprep.mubr.f32.mxu0 0.0
    %233 = vmatmul.mubr.f32.gmra.mxu0 %v75
    %v234 = vpop.f32.mrf.mxu0
    %v235 = vadd.f32 %v145, %v234
    %v236 = vpop.f32.mrf.mxu0
    %v237 = vadd.f32 %v149, %v236
    %238 = vdwg.mxu0
    %239 = vmatprep.subr.mxu0 %v139
    %240 = vmatpush1.msra.mxu0 %v138
    %241 = vmatprep.subr.mxu0 %v135
    %242 = vmatpush1.msra.mxu0 %v134
    %243 = vmatprep.subr.mxu0 %v131
    %244 = vmatpush1.msra.mxu0 %v130
    %245 = vmatprep.subr.mxu0 %v127
    %246 = vmatpush1.msra.mxu0 %v126
    %247 = vmatprep.subr.mxu0 %v123
    %248 = vmatpush1.msra.mxu0 %v122
    %249 = vmatprep.subr.mxu0 %v119
    %250 = vmatpush1.msra.mxu0 %v118
    %251 = vmatprep.subr.mxu0 %v115
    %252 = vmatpush1.msra.mxu0 %v114
    %253 = vmatprep.subr.mxu0 %v111
    %254 = vmatpush1.msra.mxu0 %v110
    %255 = vmatprep.subr.mxu0 %v107
    %256 = vmatpush1.msra.mxu0 %v106
    %257 = vmatprep.subr.mxu0 %v103
    %258 = vmatpush1.msra.mxu0 %v102
    %259 = vmatprep.subr.mxu0 %v99
    %260 = vmatpush1.msra.mxu0 %v98
    %261 = vmatprep.subr.mxu0 %v95
    %262 = vmatpush1.msra.mxu0 %v94
    %263 = vmatprep.subr.mxu0 %v91
    %264 = vmatpush1.msra.mxu0 %v90
    %265 = vmatprep.subr.mxu0 %v87
    %266 = vmatpush1.msra.mxu0 %v86
    %267 = vmatprep.subr.mxu0 %v83
    %268 = vmatpush1.msra.mxu0 %v82
    %269 = vmatprep.subr.mxu0 %v79
    %270 = vmatpush1.msra.mxu0 %v78
    %271 = vmatprep.subr.mxu0 0.0
    %272 = vmatpush2.msra.mxu0 0.0
    %273 = vmatprep.subr.mxu0 0.0
    %274 = vmatpush2.msra.mxu0 0.0
    %275 = vmatprep.subr.mxu0 0.0
    %276 = vmatpush2.msra.mxu0 0.0
    %277 = vmatprep.subr.mxu0 0.0
    %278 = vmatpush2.msra.mxu0 0.0
    %279 = vmatprep.subr.mxu0 0.0
    %280 = vmatpush2.msra.mxu0 0.0
    %281 = vmatprep.subr.mxu0 0.0
    %282 = vmatpush2.msra.mxu0 0.0
    %283 = vmatprep.subr.mxu0 0.0
    %284 = vmatpush2.msra.mxu0 0.0
    %285 = vmatprep.subr.mxu0 0.0
    %286 = vmatpush2.msra.mxu0 0.0
    %287 = vmatprep.subr.mxu0 0.0
    %288 = vmatpush2.msra.mxu0 0.0
    %289 = vmatprep.subr.mxu0 0.0
    %290 = vmatpush2.msra.mxu0 0.0
    %291 = vmatprep.subr.mxu0 0.0
    %292 = vmatpush2.msra.mxu0 0.0
    %293 = vmatprep.subr.mxu0 0.0
    %294 = vmatpush2.msra.mxu0 0.0
    %295 = vmatprep.subr.mxu0 0.0
    %296 = vmatpush2.msra.mxu0 0.0
    %297 = vmatprep.subr.mxu0 0.0
    %298 = vmatpush2.msra.mxu0 0.0
    %299 = vmatprep.subr.mxu0 0.0
    %300 = vmatpush2.msra.mxu0 0.0
    %301 = vmatprep.subr.mxu0 0.0
    %302 = vmatpush2.msra.mxu0 0.0
    %303 = vmatprep.mubr.f32.mxu0 0.0
    %304 = vmatmul.mubr.f32.gmra.mxu0 %v74
    %v305 = vpop.f32.mrf.mxu0
    %v306 = vadd.f32 %v153, %v305
    %v307 = vpop.f32.mrf.mxu0
    %v308 = vadd.f32 %v157, %v307
    %309 = vmatprep.mubr.f32.mxu0 0.0
    %310 = vmatmul.mubr.f32.gmra.mxu0 %v75
    %v311 = vpop.f32.mrf.mxu0
    %v312 = vadd.f32 %v153, %v311
    %v313 = vpop.f32.mrf.mxu0
    %v314 = vadd.f32 %v157, %v313
    %315 = vdwg.mxu0
    %v316 = vmul.f32 %v229, %v229
    %v317 = vmul.f32 %v231, %v231
    %v318 = vmul.f32 %v306, %v306
    %v319 = vmul.f32 %v308, %v308
    %v320 = vmul.f32 %v235, %v235
    %v321 = vmul.f32 %v237, %v237
    %v322 = vmul.f32 %v312, %v312
    %v323 = vmul.f32 %v314, %v314
    %v324 = vmul.f32 %v316, 0.035677407
    %v325 = vmul.f32 %v317, 0.035677407
    %v326 = vmul.f32 %v318, 0.035677407
    %v327 = vmul.f32 %v319, 0.035677407
    %v328 = vmul.f32 %v320, 0.035677407
    %v329 = vmul.f32 %v321, 0.035677407
    %v330 = vmul.f32 %v322, 0.035677407
    %v331 = vmul.f32 %v323, 0.035677407
    %v332 = vadd.f32 %v324, 0.7978846
    %v333 = vadd.f32 %v325, 0.7978846
    %v334 = vadd.f32 %v326, 0.7978846
    %v335 = vadd.f32 %v327, 0.7978846
    %v336 = vadd.f32 %v328, 0.7978846
    %v337 = vadd.f32 %v329, 0.7978846
    %v338 = vadd.f32 %v330, 0.7978846
    %v339 = vadd.f32 %v331, 0.7978846
    %v340 = vmul.f32 %v229, %v332
    %v341 = vmul.f32 %v231, %v333
    %v342 = vmul.f32 %v306, %v334
    %v343 = vmul.f32 %v308, %v335
    %v344 = vmul.f32 %v235, %v336
    %v345 = vmul.f32 %v237, %v337
    %v346 = vmul.f32 %v312, %v338
    %v347 = vmul.f32 %v314, %v339
    %v348 = vmul.f32 %v229, 0.5
    %v349 = vmul.f32 %v231, 0.5
    %v350 = vmul.f32 %v306, 0.5
    %v351 = vmul.f32 %v308, 0.5
    %v352 = vmul.f32 %v235, 0.5
    %v353 = vmul.f32 %v237, 0.5
    %v354 = vmul.f32 %v312, 0.5
    %v355 = vmul.f32 %v314, 0.5
    %v356 = vtanh.pop %v340
    %v357 = vtanh.pop %v341
    %v358 = vtanh.pop %v342
    %v359 = vtanh.pop %v343
    %v360 = vtanh.pop %v344
    %v361 = vtanh.pop %v345
    %v362 = vtanh.pop %v346
    %v363 = vtanh.pop %v347
    %v364 = vadd.f32 %v356, 1.0
    %v365 = vadd.f32 %v357, 1.0
    %v366 = vadd.f32 %v358, 1.0
    %v367 = vadd.f32 %v359, 1.0
    %v368 = vadd.f32 %v360, 1.0
    %v369 = vadd.f32 %v361, 1.0
    %v370 = vadd.f32 %v362, 1.0
    %v371 = vadd.f32 %v363, 1.0
    %v372 = vmul.f32 %v348, %v364
    %v373 = vmul.f32 %v349, %v365
    %v374 = vmul.f32 %v350, %v366
    %v375 = vmul.f32 %v351, %v367
    %v376 = vmul.f32 %v352, %v368
    %v377 = vmul.f32 %v353, %v369
    %v378 = vmul.f32 %v354, %v370
    %v379 = vmul.f32 %v355, %v371
    %v380 = vld [vmem:[#allocation8] sm:$0xff]
    %v381 = vld [vmem:[#allocation8 + $0x8] sm:$0xff]
    %v382 = vld [vmem:[#allocation8 + $0x10] sm:$0xff]
    %v383 = vld [vmem:[#allocation8 + $0x18] sm:$0xff]
    %v384 = vld [vmem:[#allocation8 + $0x20] sm:$0xff]
    %v385 = vld [vmem:[#allocation8 + $0x28] sm:$0xff]
    %v386 = vld [vmem:[#allocation8 + $0x30] sm:$0xff]
    %v387 = vld [vmem:[#allocation8 + $0x38] sm:$0xff]
    %v388 = vld [vmem:[#allocation8 + $0x40] sm:$0xff]
    %v389 = vld [vmem:[#allocation8 + $0x48] sm:$0xff]
    %v390 = vld [vmem:[#allocation8 + $0x50] sm:$0xff]
    %v391 = vld [vmem:[#allocation8 + $0x58] sm:$0xff]
    %v392 = vld [vmem:[#allocation8 + $0x60] sm:$0xff]
    %v393 = vld [vmem:[#allocation8 + $0x68] sm:$0xff]
    %v394 = vld [vmem:[#allocation8 + $0x70] sm:$0xff]
    %v395 = vld [vmem:[#allocation8 + $0x78] sm:$0xff]
    %v396 = vld [vmem:[#allocation8 + $0x80] sm:$0xff]
    %v397 = vld [vmem:[#allocation8 + $0x88] sm:$0xff]
    %v398 = vld [vmem:[#allocation8 + $0x90] sm:$0xff]
    %v399 = vld [vmem:[#allocation8 + $0x98] sm:$0xff]
    %v400 = vld [vmem:[#allocation8 + $0xa0] sm:$0xff]
    %v401 = vld [vmem:[#allocation8 + $0xa8] sm:$0xff]
    %v402 = vld [vmem:[#allocation8 + $0xb0] sm:$0xff]
    %v403 = vld [vmem:[#allocation8 + $0xb8] sm:$0xff]
    %v404 = vld [vmem:[#allocation8 + $0xc0] sm:$0xff]
    %v405 = vld [vmem:[#allocation8 + $0xc8] sm:$0xff]
    %v406 = vld [vmem:[#allocation8 + $0xd0] sm:$0xff]
    %v407 = vld [vmem:[#allocation8 + $0xd8] sm:$0xff]
    %v408 = vld [vmem:[#allocation8 + $0xe0] sm:$0xff]
    %v409 = vld [vmem:[#allocation8 + $0xe8] sm:$0xff]
    %v410 = vld [vmem:[#allocation8 + $0xf0] sm:$0xff]
    %v411 = vld [vmem:[#allocation8 + $0xf8] sm:$0xff]
    %v412 = vld [vmem:[#allocation8 + $0x100] sm:$0xff]
    %v413 = vld [vmem:[#allocation8 + $0x108] sm:$0xff]
    %v414 = vld [vmem:[#allocation8 + $0x110] sm:$0xff]
    %v415 = vld [vmem:[#allocation8 + $0x118] sm:$0xff]
    %v416 = vld [vmem:[#allocation8 + $0x120] sm:$0xff]
    %v417 = vld [vmem:[#allocation8 + $0x128] sm:$0xff]
    %v418 = vld [vmem:[#allocation8 + $0x130] sm:$0xff]
    %v419 = vld [vmem:[#allocation8 + $0x138] sm:$0xff]
    %v420 = vld [vmem:[#allocation8 + $0x140] sm:$0xff]
    %v421 = vld [vmem:[#allocation8 + $0x148] sm:$0xff]
    %v422 = vld [vmem:[#allocation8 + $0x150] sm:$0xff]
    %v423 = vld [vmem:[#allocation8 + $0x158] sm:$0xff]
    %v424 = vld [vmem:[#allocation8 + $0x160] sm:$0xff]
    %v425 = vld [vmem:[#allocation8 + $0x168] sm:$0xff]
    %v426 = vld [vmem:[#allocation8 + $0x170] sm:$0xff]
    %v427 = vld [vmem:[#allocation8 + $0x178] sm:$0xff]
    %v428 = vld [vmem:[#allocation8 + $0x180] sm:$0xff]
    %v429 = vld [vmem:[#allocation8 + $0x188] sm:$0xff]
    %v430 = vld [vmem:[#allocation8 + $0x190] sm:$0xff]
    %v431 = vld [vmem:[#allocation8 + $0x198] sm:$0xff]
    %v432 = vld [vmem:[#allocation8 + $0x1a0] sm:$0xff]
    %v433 = vld [vmem:[#allocation8 + $0x1a8] sm:$0xff]
    %v434 = vld [vmem:[#allocation8 + $0x1b0] sm:$0xff]
    %v435 = vld [vmem:[#allocation8 + $0x1b8] sm:$0xff]
    %v436 = vld [vmem:[#allocation8 + $0x1c0] sm:$0xff]
    %v437 = vld [vmem:[#allocation8 + $0x1c8] sm:$0xff]
    %v438 = vld [vmem:[#allocation8 + $0x1d0] sm:$0xff]
    %v439 = vld [vmem:[#allocation8 + $0x1d8] sm:$0xff]
    %v440 = vld [vmem:[#allocation8 + $0x1e0] sm:$0xff]
    %v441 = vld [vmem:[#allocation8 + $0x1e8] sm:$0xff]
    %v442 = vld [vmem:[#allocation8 + $0x1f0] sm:$0xff]
    %v443 = vld [vmem:[#allocation8 + $0x1f8] sm:$0xff]
    %v444 = vld [vmem:[%s4] sm:$0x1]
    %v446 = vlaneseq
    %v447 = vshrl.u32 %v446, 7
    %v448 = vsub.s32 0, %v447
    %v449 = vrot.slane %v444, %v448
    %451 = vmatprep.subr.mxu0 0.0
    %452 = vmatpush1.msra.mxu0 %v395
    %453 = vmatprep.subr.mxu0 0.0
    %454 = vmatpush1.msra.mxu0 %v394
    %455 = vmatprep.subr.mxu0 0.0
    %456 = vmatpush1.msra.mxu0 %v393
    %457 = vmatprep.subr.mxu0 0.0
    %458 = vmatpush1.msra.mxu0 %v392
    %459 = vmatprep.subr.mxu0 0.0
    %460 = vmatpush1.msra.mxu0 %v391
    %461 = vmatprep.subr.mxu0 0.0
    %462 = vmatpush1.msra.mxu0 %v390
    %463 = vmatprep.subr.mxu0 0.0
    %464 = vmatpush1.msra.mxu0 %v389
    %465 = vmatprep.subr.mxu0 0.0
    %466 = vmatpush1.msra.mxu0 %v388
    %467 = vmatprep.subr.mxu0 0.0
    %468 = vmatpush1.msra.mxu0 %v387
    %469 = vmatprep.subr.mxu0 0.0
    %470 = vmatpush1.msra.mxu0 %v386
    %471 = vmatprep.subr.mxu0 0.0
    %472 = vmatpush1.msra.mxu0 %v385
    %473 = vmatprep.subr.mxu0 0.0
    %474 = vmatpush1.msra.mxu0 %v384
    %475 = vmatprep.subr.mxu0 0.0
    %476 = vmatpush1.msra.mxu0 %v383
    %477 = vmatprep.subr.mxu0 0.0
    %478 = vmatpush1.msra.mxu0 %v382
    %479 = vmatprep.subr.mxu0 0.0
    %480 = vmatpush1.msra.mxu0 %v381
    %481 = vmatprep.subr.mxu0 0.0
    %482 = vmatpush1.msra.mxu0 %v380
    %483 = vmatprep.subr.mxu0 0.0
    %484 = vmatpush2.msra.mxu0 %v411
    %485 = vmatprep.subr.mxu0 0.0
    %486 = vmatpush2.msra.mxu0 %v410
    %487 = vmatprep.subr.mxu0 0.0
    %488 = vmatpush2.msra.mxu0 %v409
    %489 = vmatprep.subr.mxu0 0.0
    %490 = vmatpush2.msra.mxu0 %v408
    %491 = vmatprep.subr.mxu0 0.0
    %492 = vmatpush2.msra.mxu0 %v407
    %493 = vmatprep.subr.mxu0 0.0
    %494 = vmatpush2.msra.mxu0 %v406
    %495 = vmatprep.subr.mxu0 0.0
    %496 = vmatpush2.msra.mxu0 %v405
    %497 = vmatprep.subr.mxu0 0.0
    %498 = vmatpush2.msra.mxu0 %v404
    %499 = vmatprep.subr.mxu0 0.0
    %500 = vmatpush2.msra.mxu0 %v403
    %501 = vmatprep.subr.mxu0 0.0
    %502 = vmatpush2.msra.mxu0 %v402
    %503 = vmatprep.subr.mxu0 0.0
    %504 = vmatpush2.msra.mxu0 %v401
    %505 = vmatprep.subr.mxu0 0.0
    %506 = vmatpush2.msra.mxu0 %v400
    %507 = vmatprep.subr.mxu0 0.0
    %508 = vmatpush2.msra.mxu0 %v399
    %509 = vmatprep.subr.mxu0 0.0
    %510 = vmatpush2.msra.mxu0 %v398
    %511 = vmatprep.subr.mxu0 0.0
    %512 = vmatpush2.msra.mxu0 %v397
    %513 = vmatprep.subr.mxu0 0.0
    %514 = vmatpush2.msra.mxu0 %v396
    %515 = vmatprep.mubr.f32.mxu0 %v373
    %516 = vmatmul.mubr.f32.gmra.mxu0 %v372
    %v517 = vpop.f32.mrf.mxu0
    %v518 = vadd.f32 %v449, %v517
    %v519 = vpop.f32.mrf.mxu0
    %520 = vmatprep.mubr.f32.mxu0 %v377
    %521 = vmatmul.mubr.f32.gmra.mxu0 %v376
    %v522 = vpop.f32.mrf.mxu0
    %v523 = vadd.f32 %v449, %v522
    %v524 = vpop.f32.mrf.mxu0
    %525 = vdwg.mxu0
    %526 = vmatprep.subr.mxu0 0.0
    %527 = vmatpush1.msra.mxu0 %v427
    %528 = vmatprep.subr.mxu0 0.0
    %529 = vmatpush1.msra.mxu0 %v426
    %530 = vmatprep.subr.mxu0 0.0
    %531 = vmatpush1.msra.mxu0 %v425
    %532 = vmatprep.subr.mxu0 0.0
    %533 = vmatpush1.msra.mxu0 %v424
    %534 = vmatprep.subr.mxu0 0.0
    %535 = vmatpush1.msra.mxu0 %v423
    %536 = vmatprep.subr.mxu0 0.0
    %537 = vmatpush1.msra.mxu0 %v422
    %538 = vmatprep.subr.mxu0 0.0
    %539 = vmatpush1.msra.mxu0 %v421
    %540 = vmatprep.subr.mxu0 0.0
    %541 = vmatpush1.msra.mxu0 %v420
    %542 = vmatprep.subr.mxu0 0.0
    %543 = vmatpush1.msra.mxu0 %v419
    %544 = vmatprep.subr.mxu0 0.0
    %545 = vmatpush1.msra.mxu0 %v418
    %546 = vmatprep.subr.mxu0 0.0
    %547 = vmatpush1.msra.mxu0 %v417
    %548 = vmatprep.subr.mxu0 0.0
    %549 = vmatpush1.msra.mxu0 %v416
    %550 = vmatprep.subr.mxu0 0.0
    %551 = vmatpush1.msra.mxu0 %v415
    %552 = vmatprep.subr.mxu0 0.0
    %553 = vmatpush1.msra.mxu0 %v414
    %554 = vmatprep.subr.mxu0 0.0
    %555 = vmatpush1.msra.mxu0 %v413
    %556 = vmatprep.subr.mxu0 0.0
    %557 = vmatpush1.msra.mxu0 %v412
    %558 = vmatprep.subr.mxu0 0.0
    %559 = vmatpush2.msra.mxu0 %v443
    %560 = vmatprep.subr.mxu0 0.0
    %561 = vmatpush2.msra.mxu0 %v442
    %562 = vmatprep.subr.mxu0 0.0
    %563 = vmatpush2.msra.mxu0 %v441
    %564 = vmatprep.subr.mxu0 0.0
    %565 = vmatpush2.msra.mxu0 %v440
    %566 = vmatprep.subr.mxu0 0.0
    %567 = vmatpush2.msra.mxu0 %v439
    %568 = vmatprep.subr.mxu0 0.0
    %569 = vmatpush2.msra.mxu0 %v438
    %570 = vmatprep.subr.mxu0 0.0
    %571 = vmatpush2.msra.mxu0 %v437
    %572 = vmatprep.subr.mxu0 0.0
    %573 = vmatpush2.msra.mxu0 %v436
    %574 = vmatprep.subr.mxu0 0.0
    %575 = vmatpush2.msra.mxu0 %v435
    %576 = vmatprep.subr.mxu0 0.0
    %577 = vmatpush2.msra.mxu0 %v434
    %578 = vmatprep.subr.mxu0 0.0
    %579 = vmatpush2.msra.mxu0 %v433
    %580 = vmatprep.subr.mxu0 0.0
    %581 = vmatpush2.msra.mxu0 %v432
    %582 = vmatprep.subr.mxu0 0.0
    %583 = vmatpush2.msra.mxu0 %v431
    %584 = vmatprep.subr.mxu0 0.0
    %585 = vmatpush2.msra.mxu0 %v430
    %586 = vmatprep.subr.mxu0 0.0
    %587 = vmatpush2.msra.mxu0 %v429
    %588 = vmatprep.subr.mxu0 0.0
    %589 = vmatpush2.msra.mxu0 %v428
    %590 = vmatprep.mubr.f32.mxu0 %v375
    %591 = vmatmul.mubr.f32.gmra.mxu0 %v374
    %v592 = vpop.f32.mrf.mxu0
    %v593 = vadd.f32 %v518, %v592
    %v594 = vpop.f32.mrf.mxu0
    %595 = vmatprep.mubr.f32.mxu0 %v379
    %596 = vmatmul.mubr.f32.gmra.mxu0 %v378
    %v597 = vpop.f32.mrf.mxu0
    %v598 = vadd.f32 %v523, %v597
    %v599 = vpop.f32.mrf.mxu0
    %600 = vdwg.mxu0
    %601 = vst [vmem:[#allocation10] sm:$0xff] %v593
    %602 = vst [vmem:[#allocation10 + $0x8] sm:$0xff] %v598
    // Predicated region
    $region38: #{tpu_custom_call.1} parent=1 // pred_check
      _
    $region39: #{tpu_custom_call.1} parent=1 // pred_check_branch
      %604 = sbr.rel (0) target = $region41
    $region40: #{tpu_custom_call.1} parent=1 // pred_region
      %s606 = ssub.s32 256, 256
      %607 = vsyncadd [#allocation4], %s606
      %s608 = sshll.u32 [#allocation10], 4
      %s609 = int_to_ptr.vmem [resolvable:$true] %s608
      %614 = dma.vmem_to_hbm [thread:$0]  %s609, 256, %s5, [#allocation4], 128, 128, 8
    $region41: #{tpu_custom_call.1} parent=1 // pred_fallthru
      _
    // Predicated region
    $region42: #{tpu_custom_call.1} parent=1 // pred_check
      _
    $region43: #{tpu_custom_call.1} parent=1 // pred_check_branch
      %616 = sbr.rel (0) target = $region45
    $region44: #{tpu_custom_call.1} parent=1 // pred_region
      %617 = dma.done [#allocation4], 256
    $region45: #{tpu_custom_call.1} parent=1 // pred_fallthru
      _
    %618 = vsyncpa [#allocation3], 1
    %619 = vsyncpa [#allocation6], 1
    %620 = vsyncpa [#allocation9], 1
    %621 = vsyncpa [#allocation4], 1

</llo_original>
